<compile_context>
chip_gen: v7x
topology: tpu7x:2x2x1
jax: 0.10.0
libtpu: 0.0.40
codegen_flags: <defaults>
</compile_context>

<pallas_src>
import functools
import math

import jax
import jax.numpy as jnp
from jax import lax
from jax.experimental import pallas as pl
from jax.experimental.pallas import tpu as pltpu


# ----------------------------- Pallas kernel ------------------------------ #
def encoder_lstm_kernel(x_ref,                # (Tc, E)  f32 embedded inputs for this chunk
                        wx_ref,               # (E, 4H)  bf16 input->gates weight (i,f,o,g)
                        wh_ref,               # (H, 4H)  bf16 hidden->gates weight
                        b_ref,                # (1, 4H)  f32 combined bias
                        h0_ref, c0_ref,       # (1, H)   f32 initial state
                        outs_ref,             # (Tc, H)  per-chunk output slab
                        h_state_ref,          # (1, H)   recurrent h (resident / final output)
                        c_state_ref,          # (1, H)   recurrent c (resident / final output)
                        xw_ref,               # (Tc, 4H) f32 scratch: hoisted input projection
                        *, n_layers, hidden_dim, chunk, seq_len):
    H = hidden_dim
    Tc = chunk

    # Initialize the VMEM-resident recurrent state on the first chunk only.
    @pl.when(pl.program_id(0) == 0)
    def _():
        h_state_ref[...] = h0_ref[...]
        c_state_ref[...] = c0_ref[...]

    wx = wx_ref[...]                          # (E, 4H) bf16, VMEM-resident
    wh = wh_ref[...]                          # (H, 4H) bf16
    b = b_ref[...]                            # (1, 4H) f32

    # Hoisted layer-0 input projection for the whole chunk: one (Tc,E)x(E,4H)
    # matmul instead of Tc tiny ones (bias folded in).
    xw_ref[...] = jnp.dot(x_ref[...].astype(jnp.bfloat16), wx,
                          preferred_element_type=jnp.float32) + b

    base_t = pl.program_id(0) * Tc

    def step(t, carry):
        h_prev, c_prev = carry
        h, c = h_prev, c_prev
        for layer in range(n_layers):         # static: module reuses ONE LSTM
            h_b = h.astype(jnp.bfloat16)
            if layer == 0:
                gates = xw_ref[pl.ds(t, 1), :] + jnp.dot(
                    h_b, wh, preferred_element_type=jnp.float32)
            else:
                # layer > 0: the layer's input equals the current hidden state
                # (output of a 1-step LSTM == its new h), matching the PyTorch
                # forward loop which re-applies the same self.rnn.
                gates = (jnp.dot(h_b, wx, preferred_element_type=jnp.float32)
                         + jnp.dot(h_b, wh, preferred_element_type=jnp.float32)
                         + b)
            # Lane-packed gate order (i, f, o, g): one sigmoid + one tanh.
            sig = jax.nn.sigmoid(gates[:, :3 * H])
            g_g = jnp.tanh(gates[:, 3 * H:])
            i_g = sig[:, 0 * H:1 * H]
            f_g = sig[:, 1 * H:2 * H]
            o_g = sig[:, 2 * H:3 * H]
            c = f_g * c + i_g * g_g
            h = o_g * jnp.tanh(c)
        # Freeze the recurrent state on padded steps (t >= seq_len).
        valid = (base_t + t) < seq_len
        h = jnp.where(valid, h, h_prev)
        c = jnp.where(valid, c, c_prev)
        outs_ref[pl.ds(t, 1), :] = h.astype(outs_ref.dtype)
        return (h, c)

    h_fin, c_fin = lax.fori_loop(
        0, Tc, step, (h_state_ref[...], c_state_ref[...]), unroll=True)

    # State stays in VMEM across the grid; HBM writeback only at grid end.
    h_state_ref[...] = h_fin
    c_state_ref[...] = c_fin


# ------------------------------ host wrapper ------------------------------- #
@functools.partial(jax.jit, static_argnames=("n_layers", "chunk"))
def encode_sequence(tokens, h0, c0, embedding, wx, wh, b, *, n_layers, chunk=8):
    """Run the whole token sequence through one pallas_call.

    tokens: int32 (T,); h0/c0: (1, H); embedding: (V, E) f32;
    wx: (E, 4H) bf16; wh: (H, 4H) bf16; b: (1, 4H) f32.
    Returns (outs (T, H), h (1, H), c (1, H))."""
    T = tokens.shape[0]
    V, E = embedding.shape
    H = h0.shape[-1]
    Tc = chunk
    T_pad = ((T + Tc - 1) // Tc) * Tc
    if T_pad != T:
        tokens = jnp.pad(tokens, (0, T_pad - T))          # token 0 is valid; masked in-kernel
    # One dense XLA gather (replaces T per-step 128-byte embedding DMAs).
    x_all = jnp.take(embedding, tokens, axis=0)           # (T_pad, E) f32
    num_chunks = T_pad // Tc

    kernel = functools.partial(encoder_lstm_kernel, n_layers=n_layers,
                               hidden_dim=H, chunk=Tc, seq_len=T)

    grid_spec = pltpu.PrefetchScalarGridSpec(
        num_scalar_prefetch=0,
        grid=(num_chunks,),
        in_specs=[
            # Per-chunk slab of embedded inputs.
            pl.BlockSpec((Tc, E), lambda c: (c, 0)),
            # Weights / bias / initial state: constant index_map -> DMA'd once,
            # VMEM-resident for the whole sequence.
            pl.BlockSpec((E, 4 * H), lambda c: (0, 0)),
            pl.BlockSpec((H, 4 * H), lambda c: (0, 0)),
            pl.BlockSpec((1, 4 * H), lambda c: (0, 0)),
            pl.BlockSpec((1, H), lambda c: (0, 0)),
            pl.BlockSpec((1, H), lambda c: (0, 0)),
        ],
        out_specs=(
            pl.BlockSpec((Tc, H), lambda c: (c, 0)),       # sublane-dense output slab
            pl.BlockSpec((1, H), lambda c: (0, 0)),        # final h (resident accumulator)
            pl.BlockSpec((1, H), lambda c: (0, 0)),        # final c (resident accumulator)
        ),
        scratch_shapes=[pltpu.VMEM((Tc, 4 * H), jnp.float32)],
    )

    # TODO(synk): for scaled-up H on v7x (64 MiB VMEM), set vmem_limit_bytes and
    # pipeline_mode=pl.Buffered(1) on the constant-index weight specs.
    outs, h_fin, c_fin = pl.pallas_call(
        kernel,
        grid_spec=grid_spec,
        out_shape=(
            jax.ShapeDtypeStruct((T_pad, H), jnp.float32),
            jax.ShapeDtypeStruct((1, H), jnp.float32),
            jax.ShapeDtypeStruct((1, H), jnp.float32),
        ),
        compiler_params=pltpu.CompilerParams(
            dimension_semantics=("arbitrary",)),           # chunk axis is a recurrence
    )(x_all, wx, wh, b, h0, c0)
    return outs[:T], h_fin, c_fin


# --------------------------- Module equivalent ----------------------------- #
class EncoderRNNPallas:
    """Pallas/JAX equivalent of the PyTorch EncoderRNN (LSTM path)."""

    def __init__(self, vocab_size, embedding_dim, hidden_dim,
                 lstm_gru='LSTM', n_layers=1, key=jax.random.PRNGKey(0)):
        if lstm_gru != 'LSTM':
            # TODO(synk): GRU variant not implemented; only the default LSTM path.
            raise NotImplementedError("Only the default LSTM path is implemented.")
        if n_layers > 1 and embedding_dim != hidden_dim:
            raise ValueError("n_layers > 1 requires embedding_dim == hidden_dim "
                             "(same constraint as the PyTorch module).")
        self.lstm_gru = lstm_gru
        self.n_layers = n_layers
        self.hidden_size = hidden_dim
        self.embedding_dim = embedding_dim

        k_emb, k_wih, k_whh, k_bih, k_bhh = jax.random.split(key, 5)
        bound = 1.0 / math.sqrt(hidden_dim)
        H, E = hidden_dim, embedding_dim

        # nn.Embedding(vocab, E): N(0, 1)
        self.embedding = jax.random.normal(
            k_emb, (vocab_size, embedding_dim), dtype=jnp.float32)

        # nn.LSTM(E, H): weight_ih (4H, E), weight_hh (4H, H), biases (4H,)
        # (PyTorch gate row order: i, f, g, o)
        self.w_ih = jax.random.uniform(k_wih, (4 * H, E), minval=-bound,
                                       maxval=bound, dtype=jnp.float32)
        self.w_hh = jax.random.uniform(k_whh, (4 * H, H), minval=-bound,
                                       maxval=bound, dtype=jnp.float32)
        self.b_ih = jax.random.uniform(k_bih, (4 * H,), minval=-bound,
                                       maxval=bound, dtype=jnp.float32)
        self.b_hh = jax.random.uniform(k_bhh, (4 * H,), minval=-bound,
                                       maxval=bound, dtype=jnp.float32)

        # Repack gate order (i,f,g,o) -> (i,f,o,g), transpose so 4H is the lane
        # axis, and cast weights to bf16 (native MXU input dtype).
        def reorder(w):
            return jnp.concatenate(
                [w[0:H], w[H:2 * H], w[3 * H:4 * H], w[2 * H:3 * H]], axis=0)

        self.wx = jnp.asarray(reorder(self.w_ih).T, jnp.bfloat16)   # (E, 4H)
        self.wh = jnp.asarray(reorder(self.w_hh).T, jnp.bfloat16)   # (H, 4H)
        self.b = reorder((self.b_ih + self.b_hh).reshape(4 * H, 1)) \
            .reshape(1, 4 * H).astype(jnp.float32)                  # (1, 4H)

    # Single-step forward, matching the PyTorch module's signature/semantics.
    def forward(self, input_token, hidden):
        """input_token: int32 array of shape (1,); hidden: (h, c) each (1,1,H)."""
        H = self.hidden_size
        h, c = hidden
        tokens = jnp.asarray(input_token, jnp.int32).reshape(1)
        outs, h_fin, c_fin = encode_sequence(
            tokens, h.reshape(1, H).astype(jnp.float32),
            c.reshape(1, H).astype(jnp.float32),
            self.embedding, self.wx, self.wh, self.b,
            n_layers=self.n_layers)
        output = outs.reshape(1, 1, H)
        return output, (h_fin.reshape(1, 1, H), c_fin.reshape(1, 1, H))

    # Whole-sequence forward: one pallas_call for all T tokens (the perf path).
    def encode(self, tokens, hidden):
        H = self.hidden_size
        h, c = hidden
        tokens = jnp.asarray(tokens, jnp.int32).reshape(-1)
        outs, h_fin, c_fin = encode_sequence(
            tokens, h.reshape(1, H).astype(jnp.float32),
            c.reshape(1, H).astype(jnp.float32),
            self.embedding, self.wx, self.wh, self.b,
            n_layers=self.n_layers)
        T = tokens.shape[0]
        return outs.reshape(T, 1, H), (h_fin.reshape(1, 1, H),
                                       c_fin.reshape(1, 1, H))

    def initHidden(self):
        H = self.hidden_size
        return (jnp.zeros((1, 1, H), jnp.float32),
                jnp.zeros((1, 1, H), jnp.float32))


# ---------------------------- Pure-JAX reference --------------------------- #
def _ref_encode(model, tokens, hidden):
    """Mirrors the kernel numerics: bf16 matmul inputs, f32 accumulate/activations."""
    H = model.hidden_size
    h, c = hidden
    h = h.reshape(1, H).astype(jnp.float32)
    c = c.reshape(1, H).astype(jnp.float32)
    wih_t = model.w_ih.T.astype(jnp.bfloat16)   # (E, 4H) gate order i,f,g,o
    whh_t = model.w_hh.T.astype(jnp.bfloat16)   # (H, 4H)
    bias = (model.b_ih + model.b_hh).reshape(1, 4 * H).astype(jnp.float32)
    outs = []
    for t in range(int(tokens.shape[0])):
        inp = model.embedding[tokens[t]].reshape(1, -1).astype(jnp.bfloat16)
        for _ in range(model.n_layers):
            gates = (jnp.dot(inp, wih_t, preferred_element_type=jnp.float32)
                     + jnp.dot(h.astype(jnp.bfloat16), whh_t,
                               preferred_element_type=jnp.float32)
                     + bias)
            i_g, f_g, g_g, o_g = jnp.split(gates, 4, axis=-1)
            i_g = jax.nn.sigmoid(i_g)
            f_g = jax.nn.sigmoid(f_g)
            g_g = jnp.tanh(g_g)
            o_g = jax.nn.sigmoid(o_g)
            c = f_g * c + i_g * g_g
            h = o_g * jnp.tanh(c)
            inp = h.astype(jnp.bfloat16)
        outs.append(h)
    outs = jnp.stack(outs, axis=0).reshape(-1, 1, H)
    return outs, (h.reshape(1, 1, H), c.reshape(1, 1, H))


# ----------------------------------- main ---------------------------------- #
if __name__ == "__main__":
    vocab_size, embedding_dim, hidden_dim, seq_len = 50, 32, 32, 12

    key = jax.random.PRNGKey(0)
    k_model, k_tok = jax.random.split(key)

    model = EncoderRNNPallas(vocab_size, embedding_dim, hidden_dim,
                             lstm_gru='LSTM', n_layers=1, key=k_model)

    tokens = jax.random.randint(k_tok, (seq_len,), 0, vocab_size, dtype=jnp.int32)
    hidden0 = model.initHidden()

    # Full-sequence encode: one pallas_call, chunked recurrence (+ padding/mask path).
    outs, (hT, cT) = model.encode(tokens, hidden0)
    jax.block_until_ready((outs, hT, cT))

    # Single-step forward (original PyTorch signature), reuses the same kernel.
    out1, (h1, c1) = model.forward(tokens[:1], hidden0)
    jax.block_until_ready((out1, h1, c1))

    # Correctness checks against the pure-JAX reference.
    ref_outs, (ref_h, ref_c) = _ref_encode(model, tokens, hidden0)
    assert outs.shape == (seq_len, 1, hidden_dim)
    assert hT.shape == (1, 1, hidden_dim) and cT.shape == (1, 1, hidden_dim)
    assert bool(jnp.allclose(outs, ref_outs, atol=1e-4, rtol=1e-4))
    assert bool(jnp.allclose(hT, ref_h, atol=1e-4, rtol=1e-4))
    assert bool(jnp.allclose(cT, ref_c, atol=1e-4, rtol=1e-4))

    ref_out1, (ref_h1, ref_c1) = _ref_encode(model, tokens[:1], hidden0)
    assert out1.shape == (1, 1, hidden_dim)
    assert bool(jnp.allclose(out1, ref_out1, atol=1e-4, rtol=1e-4))
    assert bool(jnp.allclose(h1, ref_h1, atol=1e-4, rtol=1e-4))
    assert bool(jnp.allclose(c1, ref_c1, atol=1e-4, rtol=1e-4))

    print("KERNEL_OK")
</pallas_src>

<mosaic_0001>
module attributes {stable_mosaic.version = 11 : i64} {
  func.func @encoder_lstm_kernel(%arg0: i32, %arg1: memref<8x32xf32, #tpu.memory_space<vmem>>, %arg2: memref<32x128xbf16, #tpu.memory_space<vmem>>, %arg3: memref<32x128xbf16, #tpu.memory_space<vmem>>, %arg4: memref<1x128xf32, #tpu.memory_space<vmem>>, %arg5: memref<1x32xf32, #tpu.memory_space<vmem>>, %arg6: memref<1x32xf32, #tpu.memory_space<vmem>>, %arg7: memref<8x32xf32, #tpu.memory_space<vmem>>, %arg8: memref<1x32xf32, #tpu.memory_space<vmem>>, %arg9: memref<1x32xf32, #tpu.memory_space<vmem>>, %arg10: memref<8x128xf32, #tpu.memory_space<vmem>>) attributes {dimension_semantics = [#tpu.dimension_semantics<arbitrary>], iteration_bounds = array<i64: 2>, scalar_prefetch = 0 : i64, scratch_operands = 1 : i64, tpu.core_type = #tpu.core_type<tc>, window_params = [{transform_indices = @transform_0, window_bounds = array<i64: 8, 32>}, {pipeline_mode = #tpu.pipeline_mode<synchronous>, transform_indices = @transform_1, window_bounds = array<i64: 32, 128>}, {pipeline_mode = #tpu.pipeline_mode<synchronous>, transform_indices = @transform_2, window_bounds = array<i64: 32, 128>}, {pipeline_mode = #tpu.pipeline_mode<synchronous>, transform_indices = @transform_3, window_bounds = array<i64: 1, 128>}, {pipeline_mode = #tpu.pipeline_mode<synchronous>, transform_indices = @transform_4, window_bounds = array<i64: 1, 32>}, {pipeline_mode = #tpu.pipeline_mode<synchronous>, transform_indices = @transform_5, window_bounds = array<i64: 1, 32>}, {transform_indices = @transform_6, window_bounds = array<i64: 8, 32>}, {pipeline_mode = #tpu.pipeline_mode<synchronous>, transform_indices = @transform_7, window_bounds = array<i64: 1, 32>}, {pipeline_mode = #tpu.pipeline_mode<synchronous>, transform_indices = @transform_8, window_bounds = array<i64: 1, 32>}]} {
    %c0_i32 = arith.constant 0 : i32
    %0 = arith.cmpi eq, %arg0, %c0_i32 : i32
    %1 = arith.extui %0 : i1 to i32
    %c0_i32_0 = arith.constant 0 : i32
    %2 = arith.cmpi ne, %1, %c0_i32_0 : i32
    scf.if %2 {
      %c0_59 = arith.constant 0 : index
      %c0_60 = arith.constant 0 : index
      %233 = vector.load %arg5[%c0_59, %c0_60] : memref<1x32xf32, #tpu.memory_space<vmem>>, vector<1x32xf32>
      %c0_61 = arith.constant 0 : index
      %c0_62 = arith.constant 0 : index
      %234 = vector.load %arg8[%c0_61, %c0_62] : memref<1x32xf32, #tpu.memory_space<vmem>>, vector<1x32xf32>
      tpu.vector_store %arg8[%c0_61, %c0_62], %233 {strides = array<i32>} : memref<1x32xf32, #tpu.memory_space<vmem>>, vector<1x32xf32>,
      %c0_63 = arith.constant 0 : index
      %c0_64 = arith.constant 0 : index
      %235 = vector.load %arg6[%c0_63, %c0_64] : memref<1x32xf32, #tpu.memory_space<vmem>>, vector<1x32xf32>
      %c0_65 = arith.constant 0 : index
      %c0_66 = arith.constant 0 : index
      %236 = vector.load %arg9[%c0_65, %c0_66] : memref<1x32xf32, #tpu.memory_space<vmem>>, vector<1x32xf32>
      tpu.vector_store %arg9[%c0_65, %c0_66], %235 {strides = array<i32>} : memref<1x32xf32, #tpu.memory_space<vmem>>, vector<1x32xf32>,
    } else {
    }
    %c0 = arith.constant 0 : index
    %c0_1 = arith.constant 0 : index
    %3 = vector.load %arg2[%c0, %c0_1] : memref<32x128xbf16, #tpu.memory_space<vmem>>, vector<32x128xbf16>
    %c0_2 = arith.constant 0 : index
    %c0_3 = arith.constant 0 : index
    %4 = vector.load %arg3[%c0_2, %c0_3] : memref<32x128xbf16, #tpu.memory_space<vmem>>, vector<32x128xbf16>
    %c0_4 = arith.constant 0 : index
    %c0_5 = arith.constant 0 : index
    %5 = vector.load %arg4[%c0_4, %c0_5] : memref<1x128xf32, #tpu.memory_space<vmem>>, vector<1x128xf32>
    %c0_6 = arith.constant 0 : index
    %c0_7 = arith.constant 0 : index
    %6 = vector.load %arg1[%c0_6, %c0_7] : memref<8x32xf32, #tpu.memory_space<vmem>>, vector<8x32xf32>
    %7 = arith.truncf %6 : vector<8x32xf32> to vector<8x32xbf16>
    %cst = arith.constant dense<0.000000e+00> : vector<8x128xf32>
    %8 = tpu.matmul %7, %3, %cst {dimension_numbers = #tpu.dot_dimension_numbers<[1], [0], [0], [1], [0, 0, 1, 1], [], []>} : vector<8x32xbf16>, vector<32x128xbf16>, vector<8x128xf32> -> vector<8x128xf32>
    %9 = vector.broadcast %5 : vector<1x128xf32> to vector<8x128xf32>
    %10 = arith.addf %8, %9 : vector<8x128xf32>
    %c0_8 = arith.constant 0 : index
    %c0_9 = arith.constant 0 : index
    %11 = vector.load %arg10[%c0_8, %c0_9] : memref<8x128xf32, #tpu.memory_space<vmem>>, vector<8x128xf32>
    tpu.vector_store %arg10[%c0_8, %c0_9], %10 {strides = array<i32>} : memref<8x128xf32, #tpu.memory_space<vmem>>, vector<8x128xf32>,
    %c8_i32 = arith.constant 8 : i32
    %12 = arith.muli %arg0, %c8_i32 : i32
    %c0_10 = arith.constant 0 : index
    %c0_11 = arith.constant 0 : index
    %13 = vector.load %arg8[%c0_10, %c0_11] : memref<1x32xf32, #tpu.memory_space<vmem>>, vector<1x32xf32>
    %c0_12 = arith.constant 0 : index
    %c0_13 = arith.constant 0 : index
    %14 = vector.load %arg9[%c0_12, %c0_13] : memref<1x32xf32, #tpu.memory_space<vmem>>, vector<1x32xf32>
    %c0_i32_14 = arith.constant 0 : i32
    %15 = arith.truncf %13 : vector<1x32xf32> to vector<1x32xbf16>
    %16 = arith.index_cast %c0_i32_14 : i32 to index
    %c0_15 = arith.constant 0 : index
    %17 = vector.load %arg10[%16, %c0_15] : memref<8x128xf32, #tpu.memory_space<vmem>>, vector<1x128xf32>
    %cst_16 = arith.constant dense<0.000000e+00> : vector<1x128xf32>
    %18 = tpu.matmul %15, %4, %cst_16 {dimension_numbers = #tpu.dot_dimension_numbers<[1], [0], [0], [1], [0, 0, 1, 1], [], []>} : vector<1x32xbf16>, vector<32x128xbf16>, vector<1x128xf32> -> vector<1x128xf32>
    %19 = arith.addf %17, %18 : vector<1x128xf32>
    %20 = vector.extract_strided_slice %19 {offsets = [0, 0], sizes = [1, 96], strides = [1, 1]} : vector<1x128xf32> to vector<1x96xf32>
    %21 = arith.negf %20 : vector<1x96xf32>
    %22 = math.exp %21 : vector<1x96xf32>
    %cst_17 = arith.constant 1.000000e+00 : f32
    %23 = vector.broadcast %cst_17 : f32 to vector<1x96xf32>
    %24 = arith.addf %23, %22 : vector<1x96xf32>
    %25 = arith.divf %23, %24 : vector<1x96xf32>
    %26 = vector.extract_strided_slice %19 {offsets = [0, 96], sizes = [1, 32], strides = [1, 1]} : vector<1x128xf32> to vector<1x32xf32>
    %27 = math.tanh %26 : vector<1x32xf32>
    %28 = vector.extract_strided_slice %25 {offsets = [0, 0], sizes = [1, 32], strides = [1, 1]} : vector<1x96xf32> to vector<1x32xf32>
    %29 = vector.extract_strided_slice %25 {offsets = [0, 32], sizes = [1, 32], strides = [1, 1]} : vector<1x96xf32> to vector<1x32xf32>
    %30 = vector.extract_strided_slice %25 {offsets = [0, 64], sizes = [1, 32], strides = [1, 1]} : vector<1x96xf32> to vector<1x32xf32>
    %31 = arith.mulf %29, %14 : vector<1x32xf32>
    %32 = arith.mulf %28, %27 : vector<1x32xf32>
    %33 = arith.addf %31, %32 : vector<1x32xf32>
    %34 = math.tanh %33 : vector<1x32xf32>
    %35 = arith.mulf %30, %34 : vector<1x32xf32>
    %36 = arith.addi %12, %c0_i32_14 : i32
    %c12_i32 = arith.constant 12 : i32
    %37 = arith.cmpi slt, %36, %c12_i32 : i32
    %38 = arith.select %37, %35, %13 : vector<1x32xf32>
    %39 = arith.select %37, %33, %14 : vector<1x32xf32>
    %40 = arith.index_cast %c0_i32_14 : i32 to index
    %c0_18 = arith.constant 0 : index
    %41 = vector.load %arg7[%40, %c0_18] : memref<8x32xf32, #tpu.memory_space<vmem>>, vector<1x32xf32>
    tpu.vector_store %arg7[%40, %c0_18], %38 {strides = array<i32>} : memref<8x32xf32, #tpu.memory_space<vmem>>, vector<1x32xf32>,
    %c1_i32 = arith.constant 1 : i32
    %42 = arith.truncf %38 : vector<1x32xf32> to vector<1x32xbf16>
    %43 = arith.index_cast %c1_i32 : i32 to index
    %c0_19 = arith.constant 0 : index
    %44 = vector.load %arg10[%43, %c0_19] : memref<8x128xf32, #tpu.memory_space<vmem>>, vector<1x128xf32>
    %cst_20 = arith.constant dense<0.000000e+00> : vector<1x128xf32>
    %45 = tpu.matmul %42, %4, %cst_20 {dimension_numbers = #tpu.dot_dimension_numbers<[1], [0], [0], [1], [0, 0, 1, 1], [], []>} : vector<1x32xbf16>, vector<32x128xbf16>, vector<1x128xf32> -> vector<1x128xf32>
    %46 = arith.addf %44, %45 : vector<1x128xf32>
    %47 = vector.extract_strided_slice %46 {offsets = [0, 0], sizes = [1, 96], strides = [1, 1]} : vector<1x128xf32> to vector<1x96xf32>
    %48 = arith.negf %47 : vector<1x96xf32>
    %49 = math.exp %48 : vector<1x96xf32>
    %cst_21 = arith.constant 1.000000e+00 : f32
    %50 = vector.broadcast %cst_21 : f32 to vector<1x96xf32>
    %51 = arith.addf %50, %49 : vector<1x96xf32>
    %52 = arith.divf %50, %51 : vector<1x96xf32>
    %53 = vector.extract_strided_slice %46 {offsets = [0, 96], sizes = [1, 32], strides = [1, 1]} : vector<1x128xf32> to vector<1x32xf32>
    %54 = math.tanh %53 : vector<1x32xf32>
    %55 = vector.extract_strided_slice %52 {offsets = [0, 0], sizes = [1, 32], strides = [1, 1]} : vector<1x96xf32> to vector<1x32xf32>
    %56 = vector.extract_strided_slice %52 {offsets = [0, 32], sizes = [1, 32], strides = [1, 1]} : vector<1x96xf32> to vector<1x32xf32>
    %57 = vector.extract_strided_slice %52 {offsets = [0, 64], sizes = [1, 32], strides = [1, 1]} : vector<1x96xf32> to vector<1x32xf32>
    %58 = arith.mulf %56, %39 : vector<1x32xf32>
    %59 = arith.mulf %55, %54 : vector<1x32xf32>
    %60 = arith.addf %58, %59 : vector<1x32xf32>
    %61 = math.tanh %60 : vector<1x32xf32>
    %62 = arith.mulf %57, %61 : vector<1x32xf32>
    %63 = arith.addi %12, %c1_i32 : i32
    %c12_i32_22 = arith.constant 12 : i32
    %64 = arith.cmpi slt, %63, %c12_i32_22 : i32
    %65 = arith.select %64, %62, %38 : vector<1x32xf32>
    %66 = arith.select %64, %60, %39 : vector<1x32xf32>
    %67 = arith.index_cast %c1_i32 : i32 to index
    %c0_23 = arith.constant 0 : index
    %68 = vector.load %arg7[%67, %c0_23] : memref<8x32xf32, #tpu.memory_space<vmem>>, vector<1x32xf32>
    tpu.vector_store %arg7[%67, %c0_23], %65 {strides = array<i32>} : memref<8x32xf32, #tpu.memory_space<vmem>>, vector<1x32xf32>,
    %c2_i32 = arith.constant 2 : i32
    %69 = arith.truncf %65 : vector<1x32xf32> to vector<1x32xbf16>
    %70 = arith.index_cast %c2_i32 : i32 to index
    %c0_24 = arith.constant 0 : index
    %71 = vector.load %arg10[%70, %c0_24] : memref<8x128xf32, #tpu.memory_space<vmem>>, vector<1x128xf32>
    %cst_25 = arith.constant dense<0.000000e+00> : vector<1x128xf32>
    %72 = tpu.matmul %69, %4, %cst_25 {dimension_numbers = #tpu.dot_dimension_numbers<[1], [0], [0], [1], [0, 0, 1, 1], [], []>} : vector<1x32xbf16>, vector<32x128xbf16>, vector<1x128xf32> -> vector<1x128xf32>
    %73 = arith.addf %71, %72 : vector<1x128xf32>
    %74 = vector.extract_strided_slice %73 {offsets = [0, 0], sizes = [1, 96], strides = [1, 1]} : vector<1x128xf32> to vector<1x96xf32>
    %75 = arith.negf %74 : vector<1x96xf32>
    %76 = math.exp %75 : vector<1x96xf32>
    %cst_26 = arith.constant 1.000000e+00 : f32
    %77 = vector.broadcast %cst_26 : f32 to vector<1x96xf32>
    %78 = arith.addf %77, %76 : vector<1x96xf32>
    %79 = arith.divf %77, %78 : vector<1x96xf32>
    %80 = vector.extract_strided_slice %73 {offsets = [0, 96], sizes = [1, 32], strides = [1, 1]} : vector<1x128xf32> to vector<1x32xf32>
    %81 = math.tanh %80 : vector<1x32xf32>
    %82 = vector.extract_strided_slice %79 {offsets = [0, 0], sizes = [1, 32], strides = [1, 1]} : vector<1x96xf32> to vector<1x32xf32>
    %83 = vector.extract_strided_slice %79 {offsets = [0, 32], sizes = [1, 32], strides = [1, 1]} : vector<1x96xf32> to vector<1x32xf32>
    %84 = vector.extract_strided_slice %79 {offsets = [0, 64], sizes = [1, 32], strides = [1, 1]} : vector<1x96xf32> to vector<1x32xf32>
    %85 = arith.mulf %83, %66 : vector<1x32xf32>
    %86 = arith.mulf %82, %81 : vector<1x32xf32>
    %87 = arith.addf %85, %86 : vector<1x32xf32>
    %88 = math.tanh %87 : vector<1x32xf32>
    %89 = arith.mulf %84, %88 : vector<1x32xf32>
    %90 = arith.addi %12, %c2_i32 : i32
    %c12_i32_27 = arith.constant 12 : i32
    %91 = arith.cmpi slt, %90, %c12_i32_27 : i32
    %92 = arith.select %91, %89, %65 : vector<1x32xf32>
    %93 = arith.select %91, %87, %66 : vector<1x32xf32>
    %94 = arith.index_cast %c2_i32 : i32 to index
    %c0_28 = arith.constant 0 : index
    %95 = vector.load %arg7[%94, %c0_28] : memref<8x32xf32, #tpu.memory_space<vmem>>, vector<1x32xf32>
    tpu.vector_store %arg7[%94, %c0_28], %92 {strides = array<i32>} : memref<8x32xf32, #tpu.memory_space<vmem>>, vector<1x32xf32>,
    %c3_i32 = arith.constant 3 : i32
    %96 = arith.truncf %92 : vector<1x32xf32> to vector<1x32xbf16>
    %97 = arith.index_cast %c3_i32 : i32 to index
    %c0_29 = arith.constant 0 : index
    %98 = vector.load %arg10[%97, %c0_29] : memref<8x128xf32, #tpu.memory_space<vmem>>, vector<1x128xf32>
    %cst_30 = arith.constant dense<0.000000e+00> : vector<1x128xf32>
    %99 = tpu.matmul %96, %4, %cst_30 {dimension_numbers = #tpu.dot_dimension_numbers<[1], [0], [0], [1], [0, 0, 1, 1], [], []>} : vector<1x32xbf16>, vector<32x128xbf16>, vector<1x128xf32> -> vector<1x128xf32>
    %100 = arith.addf %98, %99 : vector<1x128xf32>
    %101 = vector.extract_strided_slice %100 {offsets = [0, 0], sizes = [1, 96], strides = [1, 1]} : vector<1x128xf32> to vector<1x96xf32>
    %102 = arith.negf %101 : vector<1x96xf32>
    %103 = math.exp %102 : vector<1x96xf32>
    %cst_31 = arith.constant 1.000000e+00 : f32
    %104 = vector.broadcast %cst_31 : f32 to vector<1x96xf32>
    %105 = arith.addf %104, %103 : vector<1x96xf32>
    %106 = arith.divf %104, %105 : vector<1x96xf32>
    %107 = vector.extract_strided_slice %100 {offsets = [0, 96], sizes = [1, 32], strides = [1, 1]} : vector<1x128xf32> to vector<1x32xf32>
    %108 = math.tanh %107 : vector<1x32xf32>
    %109 = vector.extract_strided_slice %106 {offsets = [0, 0], sizes = [1, 32], strides = [1, 1]} : vector<1x96xf32> to vector<1x32xf32>
    %110 = vector.extract_strided_slice %106 {offsets = [0, 32], sizes = [1, 32], strides = [1, 1]} : vector<1x96xf32> to vector<1x32xf32>
    %111 = vector.extract_strided_slice %106 {offsets = [0, 64], sizes = [1, 32], strides = [1, 1]} : vector<1x96xf32> to vector<1x32xf32>
    %112 = arith.mulf %110, %93 : vector<1x32xf32>
    %113 = arith.mulf %109, %108 : vector<1x32xf32>
    %114 = arith.addf %112, %113 : vector<1x32xf32>
    %115 = math.tanh %114 : vector<1x32xf32>
    %116 = arith.mulf %111, %115 : vector<1x32xf32>
    %117 = arith.addi %12, %c3_i32 : i32
    %c12_i32_32 = arith.constant 12 : i32
    %118 = arith.cmpi slt, %117, %c12_i32_32 : i32
    %119 = arith.select %118, %116, %92 : vector<1x32xf32>
    %120 = arith.select %118, %114, %93 : vector<1x32xf32>
    %121 = arith.index_cast %c3_i32 : i32 to index
    %c0_33 = arith.constant 0 : index
    %122 = vector.load %arg7[%121, %c0_33] : memref<8x32xf32, #tpu.memory_space<vmem>>, vector<1x32xf32>
    tpu.vector_store %arg7[%121, %c0_33], %119 {strides = array<i32>} : memref<8x32xf32, #tpu.memory_space<vmem>>, vector<1x32xf32>,
    %c4_i32 = arith.constant 4 : i32
    %123 = arith.truncf %119 : vector<1x32xf32> to vector<1x32xbf16>
    %124 = arith.index_cast %c4_i32 : i32 to index
    %c0_34 = arith.constant 0 : index
    %125 = vector.load %arg10[%124, %c0_34] : memref<8x128xf32, #tpu.memory_space<vmem>>, vector<1x128xf32>
    %cst_35 = arith.constant dense<0.000000e+00> : vector<1x128xf32>
    %126 = tpu.matmul %123, %4, %cst_35 {dimension_numbers = #tpu.dot_dimension_numbers<[1], [0], [0], [1], [0, 0, 1, 1], [], []>} : vector<1x32xbf16>, vector<32x128xbf16>, vector<1x128xf32> -> vector<1x128xf32>
    %127 = arith.addf %125, %126 : vector<1x128xf32>
    %128 = vector.extract_strided_slice %127 {offsets = [0, 0], sizes = [1, 96], strides = [1, 1]} : vector<1x128xf32> to vector<1x96xf32>
    %129 = arith.negf %128 : vector<1x96xf32>
    %130 = math.exp %129 : vector<1x96xf32>
    %cst_36 = arith.constant 1.000000e+00 : f32
    %131 = vector.broadcast %cst_36 : f32 to vector<1x96xf32>
    %132 = arith.addf %131, %130 : vector<1x96xf32>
    %133 = arith.divf %131, %132 : vector<1x96xf32>
    %134 = vector.extract_strided_slice %127 {offsets = [0, 96], sizes = [1, 32], strides = [1, 1]} : vector<1x128xf32> to vector<1x32xf32>
    %135 = math.tanh %134 : vector<1x32xf32>
    %136 = vector.extract_strided_slice %133 {offsets = [0, 0], sizes = [1, 32], strides = [1, 1]} : vector<1x96xf32> to vector<1x32xf32>
    %137 = vector.extract_strided_slice %133 {offsets = [0, 32], sizes = [1, 32], strides = [1, 1]} : vector<1x96xf32> to vector<1x32xf32>
    %138 = vector.extract_strided_slice %133 {offsets = [0, 64], sizes = [1, 32], strides = [1, 1]} : vector<1x96xf32> to vector<1x32xf32>
    %139 = arith.mulf %137, %120 : vector<1x32xf32>
    %140 = arith.mulf %136, %135 : vector<1x32xf32>
    %141 = arith.addf %139, %140 : vector<1x32xf32>
    %142 = math.tanh %141 : vector<1x32xf32>
    %143 = arith.mulf %138, %142 : vector<1x32xf32>
    %144 = arith.addi %12, %c4_i32 : i32
    %c12_i32_37 = arith.constant 12 : i32
    %145 = arith.cmpi slt, %144, %c12_i32_37 : i32
    %146 = arith.select %145, %143, %119 : vector<1x32xf32>
    %147 = arith.select %145, %141, %120 : vector<1x32xf32>
    %148 = arith.index_cast %c4_i32 : i32 to index
    %c0_38 = arith.constant 0 : index
    %149 = vector.load %arg7[%148, %c0_38] : memref<8x32xf32, #tpu.memory_space<vmem>>, vector<1x32xf32>
    tpu.vector_store %arg7[%148, %c0_38], %146 {strides = array<i32>} : memref<8x32xf32, #tpu.memory_space<vmem>>, vector<1x32xf32>,
    %c5_i32 = arith.constant 5 : i32
    %150 = arith.truncf %146 : vector<1x32xf32> to vector<1x32xbf16>
    %151 = arith.index_cast %c5_i32 : i32 to index
    %c0_39 = arith.constant 0 : index
    %152 = vector.load %arg10[%151, %c0_39] : memref<8x128xf32, #tpu.memory_space<vmem>>, vector<1x128xf32>
    %cst_40 = arith.constant dense<0.000000e+00> : vector<1x128xf32>
    %153 = tpu.matmul %150, %4, %cst_40 {dimension_numbers = #tpu.dot_dimension_numbers<[1], [0], [0], [1], [0, 0, 1, 1], [], []>} : vector<1x32xbf16>, vector<32x128xbf16>, vector<1x128xf32> -> vector<1x128xf32>
    %154 = arith.addf %152, %153 : vector<1x128xf32>
    %155 = vector.extract_strided_slice %154 {offsets = [0, 0], sizes = [1, 96], strides = [1, 1]} : vector<1x128xf32> to vector<1x96xf32>
    %156 = arith.negf %155 : vector<1x96xf32>
    %157 = math.exp %156 : vector<1x96xf32>
    %cst_41 = arith.constant 1.000000e+00 : f32
    %158 = vector.broadcast %cst_41 : f32 to vector<1x96xf32>
    %159 = arith.addf %158, %157 : vector<1x96xf32>
    %160 = arith.divf %158, %159 : vector<1x96xf32>
    %161 = vector.extract_strided_slice %154 {offsets = [0, 96], sizes = [1, 32], strides = [1, 1]} : vector<1x128xf32> to vector<1x32xf32>
    %162 = math.tanh %161 : vector<1x32xf32>
    %163 = vector.extract_strided_slice %160 {offsets = [0, 0], sizes = [1, 32], strides = [1, 1]} : vector<1x96xf32> to vector<1x32xf32>
    %164 = vector.extract_strided_slice %160 {offsets = [0, 32], sizes = [1, 32], strides = [1, 1]} : vector<1x96xf32> to vector<1x32xf32>
    %165 = vector.extract_strided_slice %160 {offsets = [0, 64], sizes = [1, 32], strides = [1, 1]} : vector<1x96xf32> to vector<1x32xf32>
    %166 = arith.mulf %164, %147 : vector<1x32xf32>
    %167 = arith.mulf %163, %162 : vector<1x32xf32>
    %168 = arith.addf %166, %167 : vector<1x32xf32>
    %169 = math.tanh %168 : vector<1x32xf32>
    %170 = arith.mulf %165, %169 : vector<1x32xf32>
    %171 = arith.addi %12, %c5_i32 : i32
    %c12_i32_42 = arith.constant 12 : i32
    %172 = arith.cmpi slt, %171, %c12_i32_42 : i32
    %173 = arith.select %172, %170, %146 : vector<1x32xf32>
    %174 = arith.select %172, %168, %147 : vector<1x32xf32>
    %175 = arith.index_cast %c5_i32 : i32 to index
    %c0_43 = arith.constant 0 : index
    %176 = vector.load %arg7[%175, %c0_43] : memref<8x32xf32, #tpu.memory_space<vmem>>, vector<1x32xf32>
    tpu.vector_store %arg7[%175, %c0_43], %173 {strides = array<i32>} : memref<8x32xf32, #tpu.memory_space<vmem>>, vector<1x32xf32>,
    %c6_i32 = arith.constant 6 : i32
    %177 = arith.truncf %173 : vector<1x32xf32> to vector<1x32xbf16>
    %178 = arith.index_cast %c6_i32 : i32 to index
    %c0_44 = arith.constant 0 : index
    %179 = vector.load %arg10[%178, %c0_44] : memref<8x128xf32, #tpu.memory_space<vmem>>, vector<1x128xf32>
    %cst_45 = arith.constant dense<0.000000e+00> : vector<1x128xf32>
    %180 = tpu.matmul %177, %4, %cst_45 {dimension_numbers = #tpu.dot_dimension_numbers<[1], [0], [0], [1], [0, 0, 1, 1], [], []>} : vector<1x32xbf16>, vector<32x128xbf16>, vector<1x128xf32> -> vector<1x128xf32>
    %181 = arith.addf %179, %180 : vector<1x128xf32>
    %182 = vector.extract_strided_slice %181 {offsets = [0, 0], sizes = [1, 96], strides = [1, 1]} : vector<1x128xf32> to vector<1x96xf32>
    %183 = arith.negf %182 : vector<1x96xf32>
    %184 = math.exp %183 : vector<1x96xf32>
    %cst_46 = arith.constant 1.000000e+00 : f32
    %185 = vector.broadcast %cst_46 : f32 to vector<1x96xf32>
    %186 = arith.addf %185, %184 : vector<1x96xf32>
    %187 = arith.divf %185, %186 : vector<1x96xf32>
    %188 = vector.extract_strided_slice %181 {offsets = [0, 96], sizes = [1, 32], strides = [1, 1]} : vector<1x128xf32> to vector<1x32xf32>
    %189 = math.tanh %188 : vector<1x32xf32>
    %190 = vector.extract_strided_slice %187 {offsets = [0, 0], sizes = [1, 32], strides = [1, 1]} : vector<1x96xf32> to vector<1x32xf32>
    %191 = vector.extract_strided_slice %187 {offsets = [0, 32], sizes = [1, 32], strides = [1, 1]} : vector<1x96xf32> to vector<1x32xf32>
    %192 = vector.extract_strided_slice %187 {offsets = [0, 64], sizes = [1, 32], strides = [1, 1]} : vector<1x96xf32> to vector<1x32xf32>
    %193 = arith.mulf %191, %174 : vector<1x32xf32>
    %194 = arith.mulf %190, %189 : vector<1x32xf32>
    %195 = arith.addf %193, %194 : vector<1x32xf32>
    %196 = math.tanh %195 : vector<1x32xf32>
    %197 = arith.mulf %192, %196 : vector<1x32xf32>
    %198 = arith.addi %12, %c6_i32 : i32
    %c12_i32_47 = arith.constant 12 : i32
    %199 = arith.cmpi slt, %198, %c12_i32_47 : i32
    %200 = arith.select %199, %197, %173 : vector<1x32xf32>
    %201 = arith.select %199, %195, %174 : vector<1x32xf32>
    %202 = arith.index_cast %c6_i32 : i32 to index
    %c0_48 = arith.constant 0 : index
    %203 = vector.load %arg7[%202, %c0_48] : memref<8x32xf32, #tpu.memory_space<vmem>>, vector<1x32xf32>
    tpu.vector_store %arg7[%202, %c0_48], %200 {strides = array<i32>} : memref<8x32xf32, #tpu.memory_space<vmem>>, vector<1x32xf32>,
    %c7_i32 = arith.constant 7 : i32
    %204 = arith.truncf %200 : vector<1x32xf32> to vector<1x32xbf16>
    %205 = arith.index_cast %c7_i32 : i32 to index
    %c0_49 = arith.constant 0 : index
    %206 = vector.load %arg10[%205, %c0_49] : memref<8x128xf32, #tpu.memory_space<vmem>>, vector<1x128xf32>
    %cst_50 = arith.constant dense<0.000000e+00> : vector<1x128xf32>
    %207 = tpu.matmul %204, %4, %cst_50 {dimension_numbers = #tpu.dot_dimension_numbers<[1], [0], [0], [1], [0, 0, 1, 1], [], []>} : vector<1x32xbf16>, vector<32x128xbf16>, vector<1x128xf32> -> vector<1x128xf32>
    %208 = arith.addf %206, %207 : vector<1x128xf32>
    %209 = vector.extract_strided_slice %208 {offsets = [0, 0], sizes = [1, 96], strides = [1, 1]} : vector<1x128xf32> to vector<1x96xf32>
    %210 = arith.negf %209 : vector<1x96xf32>
    %211 = math.exp %210 : vector<1x96xf32>
    %cst_51 = arith.constant 1.000000e+00 : f32
    %212 = vector.broadcast %cst_51 : f32 to vector<1x96xf32>
    %213 = arith.addf %212, %211 : vector<1x96xf32>
    %214 = arith.divf %212, %213 : vector<1x96xf32>
    %215 = vector.extract_strided_slice %208 {offsets = [0, 96], sizes = [1, 32], strides = [1, 1]} : vector<1x128xf32> to vector<1x32xf32>
    %216 = math.tanh %215 : vector<1x32xf32>
    %217 = vector.extract_strided_slice %214 {offsets = [0, 0], sizes = [1, 32], strides = [1, 1]} : vector<1x96xf32> to vector<1x32xf32>
    %218 = vector.extract_strided_slice %214 {offsets = [0, 32], sizes = [1, 32], strides = [1, 1]} : vector<1x96xf32> to vector<1x32xf32>
    %219 = vector.extract_strided_slice %214 {offsets = [0, 64], sizes = [1, 32], strides = [1, 1]} : vector<1x96xf32> to vector<1x32xf32>
    %220 = arith.mulf %218, %201 : vector<1x32xf32>
    %221 = arith.mulf %217, %216 : vector<1x32xf32>
    %222 = arith.addf %220, %221 : vector<1x32xf32>
    %223 = math.tanh %222 : vector<1x32xf32>
    %224 = arith.mulf %219, %223 : vector<1x32xf32>
    %225 = arith.addi %12, %c7_i32 : i32
    %c12_i32_52 = arith.constant 12 : i32
    %226 = arith.cmpi slt, %225, %c12_i32_52 : i32
    %227 = arith.select %226, %224, %200 : vector<1x32xf32>
    %228 = arith.select %226, %222, %201 : vector<1x32xf32>
    %229 = arith.index_cast %c7_i32 : i32 to index
    %c0_53 = arith.constant 0 : index
    %230 = vector.load %arg7[%229, %c0_53] : memref<8x32xf32, #tpu.memory_space<vmem>>, vector<1x32xf32>
    tpu.vector_store %arg7[%229, %c0_53], %227 {strides = array<i32>} : memref<8x32xf32, #tpu.memory_space<vmem>>, vector<1x32xf32>,
    %c8_i32_54 = arith.constant 8 : i32
    %c0_55 = arith.constant 0 : index
    %c0_56 = arith.constant 0 : index
    %231 = vector.load %arg8[%c0_55, %c0_56] : memref<1x32xf32, #tpu.memory_space<vmem>>, vector<1x32xf32>
    tpu.vector_store %arg8[%c0_55, %c0_56], %227 {strides = array<i32>} : memref<1x32xf32, #tpu.memory_space<vmem>>, vector<1x32xf32>,
    %c0_57 = arith.constant 0 : index
    %c0_58 = arith.constant 0 : index
    %232 = vector.load %arg9[%c0_57, %c0_58] : memref<1x32xf32, #tpu.memory_space<vmem>>, vector<1x32xf32>
    tpu.vector_store %arg9[%c0_57, %c0_58], %228 {strides = array<i32>} : memref<1x32xf32, #tpu.memory_space<vmem>>, vector<1x32xf32>,
    return
  }
  func.func @transform_0(%arg0: i32) -> (i32, i32) {
    %c0_i32 = arith.constant 0 : i32
    %c0_i32_0 = arith.constant 0 : i32
    return %arg0, %c0_i32 : i32, i32
  }
  func.func @transform_1(%arg0: i32) -> (i32, i32) {
    %c0_i32 = arith.constant 0 : i32
    %c0_i32_0 = arith.constant 0 : i32
    %c0_i32_1 = arith.constant 0 : i32
    return %c0_i32, %c0_i32_0 : i32, i32
  }
  func.func @transform_2(%arg0: i32) -> (i32, i32) {
    %c0_i32 = arith.constant 0 : i32
    %c0_i32_0 = arith.constant 0 : i32
    %c0_i32_1 = arith.constant 0 : i32
    return %c0_i32, %c0_i32_0 : i32, i32
  }
  func.func @transform_3(%arg0: i32) -> (i32, i32) {
    %c0_i32 = arith.constant 0 : i32
    %c0_i32_0 = arith.constant 0 : i32
    %c0_i32_1 = arith.constant 0 : i32
    return %c0_i32, %c0_i32_0 : i32, i32
  }
  func.func @transform_4(%arg0: i32) -> (i32, i32) {
    %c0_i32 = arith.constant 0 : i32
    %c0_i32_0 = arith.constant 0 : i32
    %c0_i32_1 = arith.constant 0 : i32
    return %c0_i32, %c0_i32_0 : i32, i32
  }
  func.func @transform_5(%arg0: i32) -> (i32, i32) {
    %c0_i32 = arith.constant 0 : i32
    %c0_i32_0 = arith.constant 0 : i32
    %c0_i32_1 = arith.constant 0 : i32
    return %c0_i32, %c0_i32_0 : i32, i32
  }
  func.func @transform_6(%arg0: i32) -> (i32, i32) {
    %c0_i32 = arith.constant 0 : i32
    %c0_i32_0 = arith.constant 0 : i32
    return %arg0, %c0_i32 : i32, i32
  }
  func.func @transform_7(%arg0: i32) -> (i32, i32) {
    %c0_i32 = arith.constant 0 : i32
    %c0_i32_0 = arith.constant 0 : i32
    %c0_i32_1 = arith.constant 0 : i32
    return %c0_i32, %c0_i32_0 : i32, i32
  }
  func.func @transform_8(%arg0: i32) -> (i32, i32) {
    %c0_i32 = arith.constant 0 : i32
    %c0_i32_0 = arith.constant 0 : i32
    %c0_i32_1 = arith.constant 0 : i32
    return %c0_i32, %c0_i32_0 : i32, i32
  }
}

</mosaic_0001>

<llo_original>
// kernel: encode_sequence.1
$region0: #{encode_sequence.1}
  #allocation0 [shape = 'u32[]', space=smem, size = 0x4, offset = 0x4, fixed_abs, tag = 'smem constant byte address 0x4 - core index']
  #allocation1 [shape = 'u32[144,128]{1,0:T(1,128)}', space=vmem, size = 0x12000, scoped, tag = 'internal scratch']
  #allocation2 [shape = 'f32[8,128]{1,0:T(8,128)}', space=vmem, size = 0x1000, scoped, tag = 'scratch operand']
  %s0 = inlined_call_operand.vmem [shape: f32[16,32], index: 0, kind: input, shape index: {}]
  %s1 = inlined_call_operand.vmem [shape: bf16[32,128], index: 1, kind: input, shape index: {}]
  %s2 = inlined_call_operand.vmem [shape: bf16[32,128], index: 2, kind: input, shape index: {}]
  %s3 = inlined_call_operand.vmem [shape: f32[1,128], index: 3, kind: input, shape index: {}]
  %s4 = inlined_call_operand.vmem [shape: f32[1,32], index: 4, kind: input, shape index: {}]
  %s5 = inlined_call_operand.vmem [shape: f32[1,32], index: 5, kind: input, shape index: {}]
  %s6 = inlined_call_operand.hbm [shape: f32[16,32], index: 6, kind: output, shape index: {0}]
  %s7 = inlined_call_operand.hbm [shape: f32[1,32], index: 7, kind: output, shape index: {1}]
  %s8 = inlined_call_operand.hbm [shape: f32[1,32], index: 8, kind: output, shape index: {2}]
  %9 = xla_tuple %s6, %s7, %s8
  %s10 = sld [smem:[#allocation0]]
  $region77: #{encode_sequence.1} parent=0
    _
  %s12 = ssub.s32 1, %s10
  %s13 = scalar_select 0, %s12, %s10
  $region1: #{encode_sequence.1} parent=0
    #allocation3 [shape = 'u8[8192]{0}', space=vmem, size = 0x2000, scoped, tag = 'output window, operand 0']
    #allocation4 [shape = 's32[2]{0}', space=sflag, size = 0x8, scoped, tag = 'scoped memory for encode_sequence.1']
    #allocation5 [shape = 'u8[512]{0}', space=vmem, size = 0x400, scoped, tag = 'output window, operand 1, single buffered']
    #allocation6 [shape = 's32[1]{0}', space=sflag, size = 0x4, scoped, tag = 'scoped memory for encode_sequence.1']
    #allocation7 [shape = 'u8[512]{0}', space=vmem, size = 0x400, scoped, tag = 'output window, operand 2, single buffered']
    %14 = vsyncpa [#allocation4], 0
    %s15 = scalar_lea.sflag [#allocation4], 1
    %16 = vsyncpa %s15, 0
    %17 = vsyncpa [#allocation6], 0
    loop: start=0, step=1, limit=4
    $region2: #{encode_sequence.1} parent=1 // loop_pre_header
      _
    $region3: #{encode_sequence.1} parent=1 // loop_header
      %s19 = sphi 0, %s23
      %p20 = scmp.ge.s32.totalorder %s19, 4
      %s29 = sphi 0, %s31
      %s32 = sphi 0, %s29
      %s33 = sphi 0, %s32
      %s49 = sphi 0, %s33
      %s53 = sphi 0, %s53
      %s55 = sphi 0, %s53
      %s56 = sphi 0, %s55
      %s70 = sphi 0, %s56
      %s74 = sphi 0, %s74
      %s76 = sphi 0, %s74
      %s77 = sphi 0, %s76
      %s91 = sphi 0, %s77
      %s95 = sphi 0, %s95
      %s97 = sphi 0, %s95
      %s98 = sphi 0, %s97
      %s112 = sphi 0, %s98
      %s116 = sphi 0, %s116
      %s118 = sphi 0, %s116
      %s119 = sphi 0, %s118
      %s133 = sphi 0, %s119
      %s137 = sphi 0, %s137
      %s139 = sphi 0, %s137
      %s140 = sphi 0, %s139
      %s154 = sphi 0, %s140
      %s160 = sphi 0, %s162
      %s163 = sphi 0, %s160
      %s164 = sphi 0, %s163
      %s180 = sphi 0, %s164
      %s184 = sphi 0, %s184
      %s186 = sphi 0, %s184
      %s187 = sphi 0, %s186
      %s201 = sphi 0, %s187
      %s205 = sphi 0, %s205
      %s207 = sphi 0, %s205
      %s208 = sphi 0, %s207
      %s222 = sphi 0, %s208
    $region4: #{encode_sequence.1} parent=1 // loop_header_branch
      %22 = sbr.rel (%p20) target = $region8
    $region5: #{encode_sequence.1} parent=1 // loop_body
      %s24 = ssub.s32 %s19, 1
      %s25 = ssub.s32 %s19, 2
      %s26 = sadd.s32 %s19, 1
      %s27 = ssub.s32 %s19, %s26
      %p28 = scmp.eq.s32.totalorder %s27, 0
      %s30 = sadd.s32 %s29, 1
      %s31 = scalar_select %p28, %s29, %s30
      %p34 = pneg %p28
      %p35 = scmp.eq.s32.totalorder %s19, 1
      %p36 = por %p34, %p35
      %p37 = scmp.ne.s32.totalorder %s29, %s32
      %p38 = scmp.eq.s32.totalorder %s19, 0
      %p39 = por %p37, %p38
      %p40 = scmp.ne.s32.totalorder %s29, %s32
      %p41 = scmp.eq.s32.totalorder %s24, 1
      %p42 = por %p40, %p41
      %p43 = scmp.ne.s32.totalorder %s32, %s33
      %p44 = scmp.eq.s32.totalorder %s24, 0
      %p45 = por %p43, %p44
      %p46 = scmp.ne.s32.totalorder %s32, %s33
      %p47 = scmp.eq.s32.totalorder %s25, 1
      %p48 = por %p46, %p47
      %p50 = scmp.ne.s32.totalorder %s33, %s49
      %p51 = scmp.eq.s32.totalorder %s25, 0
      %p52 = por %p50, %p51
      %s54 = sadd.s32 %s53, 1
      %p57 = scmp.eq.s32.totalorder %s19, 1
      %p58 = scmp.ne.s32.totalorder %s53, %s55
      %p59 = scmp.eq.s32.totalorder %s19, 0
      %p60 = por %p58, %p59
      %p61 = scmp.ne.s32.totalorder %s53, %s55
      %p62 = scmp.eq.s32.totalorder %s24, 1
      %p63 = por %p61, %p62
      %p64 = scmp.ne.s32.totalorder %s55, %s56
      %p65 = scmp.eq.s32.totalorder %s24, 0
      %p66 = por %p64, %p65
      %p67 = scmp.ne.s32.totalorder %s55, %s56
      %p68 = scmp.eq.s32.totalorder %s25, 1
      %p69 = por %p67, %p68
      %p71 = scmp.ne.s32.totalorder %s56, %s70
      %p72 = scmp.eq.s32.totalorder %s25, 0
      %p73 = por %p71, %p72
      %s75 = sadd.s32 %s74, 1
      %p78 = scmp.eq.s32.totalorder %s19, 1
      %p79 = scmp.ne.s32.totalorder %s74, %s76
      %p80 = scmp.eq.s32.totalorder %s19, 0
      %p81 = por %p79, %p80
      %p82 = scmp.ne.s32.totalorder %s74, %s76
      %p83 = scmp.eq.s32.totalorder %s24, 1
      %p84 = por %p82, %p83
      %p85 = scmp.ne.s32.totalorder %s76, %s77
      %p86 = scmp.eq.s32.totalorder %s24, 0
      %p87 = por %p85, %p86
      %p88 = scmp.ne.s32.totalorder %s76, %s77
      %p89 = scmp.eq.s32.totalorder %s25, 1
      %p90 = por %p88, %p89
      %p92 = scmp.ne.s32.totalorder %s77, %s91
      %p93 = scmp.eq.s32.totalorder %s25, 0
      %p94 = por %p92, %p93
      %s96 = sadd.s32 %s95, 1
      %p99 = scmp.eq.s32.totalorder %s19, 1
      %p100 = scmp.ne.s32.totalorder %s95, %s97
      %p101 = scmp.eq.s32.totalorder %s19, 0
      %p102 = por %p100, %p101
      %p103 = scmp.ne.s32.totalorder %s95, %s97
      %p104 = scmp.eq.s32.totalorder %s24, 1
      %p105 = por %p103, %p104
      %p106 = scmp.ne.s32.totalorder %s97, %s98
      %p107 = scmp.eq.s32.totalorder %s24, 0
      %p108 = por %p106, %p107
      %p109 = scmp.ne.s32.totalorder %s97, %s98
      %p110 = scmp.eq.s32.totalorder %s25, 1
      %p111 = por %p109, %p110
      %p113 = scmp.ne.s32.totalorder %s98, %s112
      %p114 = scmp.eq.s32.totalorder %s25, 0
      %p115 = por %p113, %p114
      %s117 = sadd.s32 %s116, 1
      %p120 = scmp.eq.s32.totalorder %s19, 1
      %p121 = scmp.ne.s32.totalorder %s116, %s118
      %p122 = scmp.eq.s32.totalorder %s19, 0
      %p123 = por %p121, %p122
      %p124 = scmp.ne.s32.totalorder %s116, %s118
      %p125 = scmp.eq.s32.totalorder %s24, 1
      %p126 = por %p124, %p125
      %p127 = scmp.ne.s32.totalorder %s118, %s119
      %p128 = scmp.eq.s32.totalorder %s24, 0
      %p129 = por %p127, %p128
      %p130 = scmp.ne.s32.totalorder %s118, %s119
      %p131 = scmp.eq.s32.totalorder %s25, 1
      %p132 = por %p130, %p131
      %p134 = scmp.ne.s32.totalorder %s119, %s133
      %p135 = scmp.eq.s32.totalorder %s25, 0
      %p136 = por %p134, %p135
      %s138 = sadd.s32 %s137, 1
      %p141 = scmp.eq.s32.totalorder %s19, 1
      %p142 = scmp.ne.s32.totalorder %s137, %s139
      %p143 = scmp.eq.s32.totalorder %s19, 0
      %p144 = por %p142, %p143
      %p145 = scmp.ne.s32.totalorder %s137, %s139
      %p146 = scmp.eq.s32.totalorder %s24, 1
      %p147 = por %p145, %p146
      %p148 = scmp.ne.s32.totalorder %s139, %s140
      %p149 = scmp.eq.s32.totalorder %s24, 0
      %p150 = por %p148, %p149
      %p151 = scmp.ne.s32.totalorder %s139, %s140
      %p152 = scmp.eq.s32.totalorder %s25, 1
      %p153 = por %p151, %p152
      %p155 = scmp.ne.s32.totalorder %s140, %s154
      %p156 = scmp.eq.s32.totalorder %s25, 0
      %p157 = por %p155, %p156
      %s158 = ssub.s32 %s19, %s26
      %p159 = scmp.eq.s32.totalorder %s158, 0
      %s161 = sadd.s32 %s160, 1
      %s162 = scalar_select %p159, %s160, %s161
      %p165 = pneg %p159
      %p166 = scmp.eq.s32.totalorder %s19, 1
      %p167 = por %p165, %p166
      %p168 = scmp.ne.s32.totalorder %s160, %s163
      %p169 = scmp.eq.s32.totalorder %s19, 0
      %p170 = por %p168, %p169
      %p171 = scmp.ne.s32.totalorder %s160, %s163
      %p172 = scmp.eq.s32.totalorder %s24, 1
      %p173 = por %p171, %p172
      %p174 = scmp.ne.s32.totalorder %s163, %s164
      %p175 = scmp.eq.s32.totalorder %s24, 0
      %p176 = por %p174, %p175
      %p177 = scmp.ne.s32.totalorder %s163, %s164
      %p178 = scmp.eq.s32.totalorder %s25, 1
      %p179 = por %p177, %p178
      %p181 = scmp.ne.s32.totalorder %s164, %s180
      %p182 = scmp.eq.s32.totalorder %s25, 0
      %p183 = por %p181, %p182
      %s185 = sadd.s32 %s184, 1
      %p188 = scmp.eq.s32.totalorder %s19, 1
      %p189 = scmp.ne.s32.totalorder %s184, %s186
      %p190 = scmp.eq.s32.totalorder %s19, 0
      %p191 = por %p189, %p190
      %p192 = scmp.ne.s32.totalorder %s184, %s186
      %p193 = scmp.eq.s32.totalorder %s24, 1
      %p194 = por %p192, %p193
      %p195 = scmp.ne.s32.totalorder %s186, %s187
      %p196 = scmp.eq.s32.totalorder %s24, 0
      %p197 = por %p195, %p196
      %p198 = scmp.ne.s32.totalorder %s186, %s187
      %p199 = scmp.eq.s32.totalorder %s25, 1
      %p200 = por %p198, %p199
      %p202 = scmp.ne.s32.totalorder %s187, %s201
      %p203 = scmp.eq.s32.totalorder %s25, 0
      %p204 = por %p202, %p203
      %s206 = sadd.s32 %s205, 1
      %p209 = scmp.eq.s32.totalorder %s19, 1
      %p210 = scmp.ne.s32.totalorder %s205, %s207
      %p211 = scmp.eq.s32.totalorder %s19, 0
      %p212 = por %p210, %p211
      %p213 = scmp.ne.s32.totalorder %s205, %s207
      %p214 = scmp.eq.s32.totalorder %s24, 1
      %p215 = por %p213, %p214
      %p216 = scmp.ne.s32.totalorder %s207, %s208
      %p217 = scmp.eq.s32.totalorder %s24, 0
      %p218 = por %p216, %p217
      %p219 = scmp.ne.s32.totalorder %s207, %s208
      %p220 = scmp.eq.s32.totalorder %s25, 1
      %p221 = por %p219, %p220
      %p223 = scmp.ne.s32.totalorder %s208, %s222
      %p224 = scmp.eq.s32.totalorder %s25, 0
      %p225 = por %p223, %p224
      %p226 = scmp.le.s32.totalorder 1, %s19
      %p227 = scmp.lt.s32.totalorder %s19, 3
      %p228 = pnand %p226, %p227
      %p229 = pneg %p228
      // Predicated region
      $region9: #{encode_sequence.1} parent=5 // pred_check
        _
      $region10: #{encode_sequence.1} parent=5 // pred_check_branch
        %231 = sbr.rel (%p228) target = $region12
      $region11: #{encode_sequence.1} parent=5 // pred_region
        %s232 = ssub.s32 %s19, 1
        // Predicated region
        $region13: #{encode_sequence.1} parent=11 // pred_check
          %p233 = pneg %p66
        $region14: #{encode_sequence.1} parent=11 // pred_check_branch
          %235 = sbr.rel (%p233) target = $region16
        $region15: #{encode_sequence.1} parent=11 // pred_region
          _
        $region16: #{encode_sequence.1} parent=11 // pred_fallthru
          _
        // Predicated region
        $region17: #{encode_sequence.1} parent=11 // pred_check
          %p236 = pneg %p87
        $region18: #{encode_sequence.1} parent=11 // pred_check_branch
          %238 = sbr.rel (%p236) target = $region20
        $region19: #{encode_sequence.1} parent=11 // pred_region
          _
        $region20: #{encode_sequence.1} parent=11 // pred_fallthru
          _
        // Predicated region
        $region21: #{encode_sequence.1} parent=11 // pred_check
          %p239 = pneg %p108
        $region22: #{encode_sequence.1} parent=11 // pred_check_branch
          %241 = sbr.rel (%p239) target = $region24
        $region23: #{encode_sequence.1} parent=11 // pred_region
          _
        $region24: #{encode_sequence.1} parent=11 // pred_fallthru
          _
        // Predicated region
        $region25: #{encode_sequence.1} parent=11 // pred_check
          %p242 = pneg %p129
        $region26: #{encode_sequence.1} parent=11 // pred_check_branch
          %244 = sbr.rel (%p242) target = $region28
        $region27: #{encode_sequence.1} parent=11 // pred_region
          _
        $region28: #{encode_sequence.1} parent=11 // pred_fallthru
          _
        // Predicated region
        $region29: #{encode_sequence.1} parent=11 // pred_check
          %p245 = pneg %p150
        $region30: #{encode_sequence.1} parent=11 // pred_check_branch
          %247 = sbr.rel (%p245) target = $region32
        $region31: #{encode_sequence.1} parent=11 // pred_region
          _
        $region32: #{encode_sequence.1} parent=11 // pred_fallthru
          _
      $region12: #{encode_sequence.1} parent=5 // pred_fallthru
        _
      %p248 = scmp.lt.s32.totalorder %s19, 2
      // Predicated region
      $region33: #{encode_sequence.1} parent=5 // pred_check
        %p249 = pneg %p248
      $region34: #{encode_sequence.1} parent=5 // pred_check_branch
        %251 = sbr.rel (%p249) target = $region36
      $region35: #{encode_sequence.1} parent=5 // pred_region
        // Predicated region
        $region37: #{encode_sequence.1} parent=35 // pred_check
          %p252 = pneg %p39
        $region38: #{encode_sequence.1} parent=35 // pred_check_branch
          %254 = sbr.rel (%p252) target = $region40
        $region39: #{encode_sequence.1} parent=35 // pred_region
          %p255 = scmp.lt.s32.totalorder %s19, 1
          %s256 = scalar_select %p255, %s19, 1
          %s257 = smul.addr %s256, 8
          %s258 = scalar_lea.vmem %s0, %s257
        $region40: #{encode_sequence.1} parent=35 // pred_fallthru
          _
      $region36: #{encode_sequence.1} parent=5 // pred_fallthru
        _
      %p259 = scmp.le.s32.totalorder 1, %s19
      %p260 = scmp.lt.s32.totalorder %s19, 3
      %p261 = pnand %p259, %p260
      %p262 = pneg %p261
      // Predicated region
      $region41: #{encode_sequence.1} parent=5 // pred_check
        _
      $region42: #{encode_sequence.1} parent=5 // pred_check_branch
        %264 = sbr.rel (%p261) target = $region44
      $region43: #{encode_sequence.1} parent=5 // pred_region
        %s265 = ssub.s32 %s19, 1
        %p266 = scmp.lt.s32.totalorder %s24, 1
        %s267 = scalar_select %p266, %s24, 1
        %s268 = smul.addr %s267, 8
        %s269 = scalar_lea.vmem %s0, %s268
        %p270 = pneg %p45
        %p271 = pneg %p42
        %p272 = pneg %p66
        %p273 = pneg %p63
        %p274 = pneg %p87
        %p275 = pneg %p84
        %p276 = pneg %p108
        %p277 = pneg %p105
        %p278 = pneg %p129
        %p279 = pneg %p126
        %p280 = pneg %p150
        %p281 = pneg %p147
        %p282 = pneg %p176
        %p283 = pneg %p173
        %s284 = sand.u32 %s163, 1
        %s285 = scalar_lea.sflag [#allocation4], %s284
        %s286 = sand.u32 %s163, 1
        %s287 = smul.addr %s286, 8
        %s288 = scalar_lea.vmem [#allocation3], %s287
        %p289 = pneg %p197
        %p290 = pneg %p194
        %p291 = pneg %p218
        %p292 = pneg %p215
        %p293 = scmp.lt.s32.totalorder %s24, 1
        %s294 = scalar_select %p293, %s24, 1
        %s295 = smul.addr %s294, 8
        %s296 = scalar_lea.vmem %s0, %s295
        %p298 = scmp.eq.s32.totalorder %s24, 0
        // Predicated region
        $region45: #{encode_sequence.1} parent=43 // pred_check
          %p299 = pneg %p298
        $region46: #{encode_sequence.1} parent=43 // pred_check_branch
          %301 = sbr.rel (%p299) target = $region48
        $region47: #{encode_sequence.1} parent=43 // pred_region
          %v302 = vld [vmem:[%s4] sm:$0x1]
          %vm303 = vcmask 253952
          %304 = vst.msk [vmem:[#allocation5] sm:$0x1] %vm303, %v302
          %v305 = vld [vmem:[%s5] sm:$0x1]
          %306 = vst.msk [vmem:[#allocation7] sm:$0x1] %vm303, %v305
        $region48: #{encode_sequence.1} parent=43 // pred_fallthru
          _
        %v307 = vld [vmem:[%s1] sm:$0xf]
        %v308 = vld [vmem:[%s1 + $0x4] sm:$0xf]
        %v309 = vld [vmem:[%s1 + $0x8] sm:$0xf]
        %v310 = vld [vmem:[%s1 + $0xc] sm:$0xf]
        %v311 = vld [vmem:[%s2] sm:$0xf]
        %v312 = vld [vmem:[%s2 + $0x4] sm:$0xf]
        %v313 = vld [vmem:[%s2 + $0x8] sm:$0xf]
        %v314 = vld [vmem:[%s2 + $0xc] sm:$0xf]
        %v315 = vld [vmem:[%s3] sm:$0x1]
        %v316 = vld [vmem:[%s296] sm:$0xff]
        %v317 = vpack.c.bf16 %v316, %v316
        %v319 = vlaneseq
        %v320 = vshrl.u32 %v319, 7
        %v321 = vsub.s32 0, %v320
        %v322 = vrot.slane %v315, %v321
        %v328 = vunpack.c.l.b16 %v307
        %v329 = vunpack.c.l.b16 %v308
        %v330 = vunpack.c.l.b16 %v309
        %v331 = vunpack.c.l.b16 %v310
        %v332 = vpack.c.b16 %v329, %v328
        %v333 = vpack.c.b16 %v331, %v330
        %vm336 = vcmask 261120
        %v338 = vsel %vm336, %v317, 0
        %340 = vmatprep.subr.bf16.mxu0 0
        %341 = vmatpush1.bf16.msra.mxu0 %v332
        %342 = vmatprep.subr.bf16.mxu0 0
        %343 = vmatpush1.bf16.msra.mxu0 %v333
        %344 = vmatprep.subr.bf16.mxu0 0
        %345 = vmatpush1.bf16.msra.mxu0 0
        %346 = vmatprep.subr.bf16.mxu0 0
        %347 = vmatpush1.bf16.msra.mxu0 0
        %348 = vmatprep.subr.bf16.mxu0 0
        %349 = vmatpush1.bf16.msra.mxu0 0
        %350 = vmatprep.subr.bf16.mxu0 0
        %351 = vmatpush1.bf16.msra.mxu0 0
        %352 = vmatprep.subr.bf16.mxu0 0
        %353 = vmatpush1.bf16.msra.mxu0 0
        %354 = vmatprep.subr.bf16.mxu0 0
        %355 = vmatpush1.bf16.msra.mxu0 0
        %356 = vmatprep.subr.bf16.mxu0 0
        %357 = vmatpush1.bf16.msra.mxu0 0
        %358 = vmatprep.subr.bf16.mxu0 0
        %359 = vmatpush1.bf16.msra.mxu0 0
        %360 = vmatprep.subr.bf16.mxu0 0
        %361 = vmatpush1.bf16.msra.mxu0 0
        %362 = vmatprep.subr.bf16.mxu0 0
        %363 = vmatpush1.bf16.msra.mxu0 0
        %364 = vmatprep.subr.bf16.mxu0 0
        %365 = vmatpush1.bf16.msra.mxu0 0
        %366 = vmatprep.subr.bf16.mxu0 0
        %367 = vmatpush1.bf16.msra.mxu0 0
        %368 = vmatprep.subr.bf16.mxu0 0
        %369 = vmatpush1.bf16.msra.mxu0 0
        %370 = vmatprep.subr.bf16.mxu0 0
        %371 = vmatpush1.bf16.msra.mxu0 0
        %372 = vmatprep.mubr.bf16.mxu0 0
        %373 = vmatmul.mubr.bf16.gmra.mrb[0].mxu0 %v338
        %v374 = vpop.f32.mrb[0].mxu0
        %v375 = vadd.f32 %v322, %v374
        %v376 = vpop.f32.mrb[0].mxu0
        %v377 = vpop.f32.mrb[0].mxu0
        %v378 = vpop.f32.mrb[0].mxu0
        %379 = vdwg.mxu0
        %380 = vst [vmem:[#allocation2] sm:$0xff] %v375
        %s381 = smul.u32 %s24, 8
        %v382 = vld [vmem:[#allocation5] sm:$0x1]
        %v383 = vld [vmem:[#allocation7] sm:$0x1]
        %v384 = vpack.c.bf16 %v382, %v382
        %v385 = vld [vmem:[#allocation2] sm:$0x1]
        %v390 = vunpack.c.l.b16 %v311
        %v391 = vunpack.c.l.b16 %v312
        %v392 = vunpack.c.l.b16 %v313
        %v393 = vunpack.c.l.b16 %v314
        %v394 = vpack.c.b16 %v391, %v390
        %v395 = vpack.c.b16 %v393, %v392
        %v399 = vsel %vm336, %v384, 0
        %401 = vmatprep.subr.bf16.mxu0 0
        %402 = vmatpush1.bf16.msra.mxu0 %v394
        %403 = vmatprep.subr.bf16.mxu0 0
        %404 = vmatpush1.bf16.msra.mxu0 %v395
        %405 = vmatprep.subr.bf16.mxu0 0
        %406 = vmatpush1.bf16.msra.mxu0 0
        %407 = vmatprep.subr.bf16.mxu0 0
        %408 = vmatpush1.bf16.msra.mxu0 0
        %409 = vmatprep.subr.bf16.mxu0 0
        %410 = vmatpush1.bf16.msra.mxu0 0
        %411 = vmatprep.subr.bf16.mxu0 0
        %412 = vmatpush1.bf16.msra.mxu0 0
        %413 = vmatprep.subr.bf16.mxu0 0
        %414 = vmatpush1.bf16.msra.mxu0 0
        %415 = vmatprep.subr.bf16.mxu0 0
        %416 = vmatpush1.bf16.msra.mxu0 0
        %417 = vmatprep.subr.bf16.mxu0 0
        %418 = vmatpush1.bf16.msra.mxu0 0
        %419 = vmatprep.subr.bf16.mxu0 0
        %420 = vmatpush1.bf16.msra.mxu0 0
        %421 = vmatprep.subr.bf16.mxu0 0
        %422 = vmatpush1.bf16.msra.mxu0 0
        %423 = vmatprep.subr.bf16.mxu0 0
        %424 = vmatpush1.bf16.msra.mxu0 0
        %425 = vmatprep.subr.bf16.mxu0 0
        %426 = vmatpush1.bf16.msra.mxu0 0
        %427 = vmatprep.subr.bf16.mxu0 0
        %428 = vmatpush1.bf16.msra.mxu0 0
        %429 = vmatprep.subr.bf16.mxu0 0
        %430 = vmatpush1.bf16.msra.mxu0 0
        %431 = vmatprep.subr.bf16.mxu0 0
        %432 = vmatpush1.bf16.msra.mxu0 0
        %433 = vmatprep.mubr.bf16.mxu0 0
        %434 = vmatmul.mubr.bf16.gmra.mrb[0].mxu0 %v399
        %v435 = vpop.f32.mrb[0].mxu0
        %v436 = vadd.f32 0.0, %v435
        %v437 = vpop.f32.mrb[0].mxu0
        %v438 = vpop.f32.mrb[0].mxu0
        %v439 = vpop.f32.mrb[0].mxu0
        %440 = vdwg.mxu0
        %v441 = vadd.f32 %v385, %v436
        %v442 = vxor.u32 %v441, 2147483648
        %v443 = vmul.f32 %v442, 1.442695
        %v444 = vpow.pop %v443
        %v445 = vadd.f32 %v444, 1.0
        %v446 = vrcp.pop %v445
        %v447 = vmul.f32 1.0, %v446
        %v448 = vtanh.pop %v441
        %v450 = vlaneseq
        %v451 = vshrl.u32 %v450, 7
        %v452 = vsub.s32 0, %v451
        %v453 = vrot.slane %v383, %v452
        %454 = vrot.lane.b32.xlu0 %v453, 32
        %v455 = vpop.permute.xlu0 %454
        %v457 = vmul.f32 %v447, %v455
        %459 = vrot.lane.b32.xlu0 %v448, 32
        %v460 = vpop.permute.xlu0 %459
        %v462 = vmul.f32 %v447, %v460
        %464 = vrot.lane.b32.xlu0 %v462, 32
        %v465 = vpop.permute.xlu0 %464
        %v467 = vadd.f32 %v457, %v465
        %v468 = vtanh.pop %v467
        %470 = vrot.lane.b32.xlu0 %v468, 32
        %v471 = vpop.permute.xlu0 %470
        %v473 = vmul.f32 %v447, %v471
        %p474 = scmp.lt.s32.totalorder %s381, 12
        %s475 = scalar_select %p474, 1, 0
        %v476 = vstv %s475
        %vm477 = vcmp.eq.s32.totalorder %v476, 1
        %v479 = vlaneseq
        %v480 = vshrl.u32 %v479, 7
        %v481 = vsub.s32 0, %v480
        %v482 = vrot.slane %v382, %v481
        %483 = vrot.lane.b32.xlu0 %v482, 64
        %v484 = vpop.permute.xlu0 %483
        %v486 = vsel %vm477, %v473, %v484
        %v487 = vsel %vm477, %v467, %v455
        %489 = vrot.lane.b32.xlu0 %v486, 64
        %v490 = vpop.permute.xlu0 %489
        %vm492 = vcmask 253952
        %493 = vst.msk [vmem:[%s288] sm:$0x1] %vm492, %v490
        %v494 = vpack.c.bf16 %v486, %v486
        %v495 = vld [vmem:[#allocation2 + $0x1] sm:$0x1]
        %497 = vrot.lane.b32.xlu0 %v494, 64
        %v498 = vpop.permute.xlu0 %497
        %v500 = vsel %vm336, %v498, 0
        %502 = vmatprep.subr.bf16.mxu0 0
        %503 = vmatpush1.bf16.msra.mxu0 %v394
        %504 = vmatprep.subr.bf16.mxu0 0
        %505 = vmatpush1.bf16.msra.mxu0 %v395
        %506 = vmatprep.subr.bf16.mxu0 0
        %507 = vmatpush1.bf16.msra.mxu0 0
        %508 = vmatprep.subr.bf16.mxu0 0
        %509 = vmatpush1.bf16.msra.mxu0 0
        %510 = vmatprep.subr.bf16.mxu0 0
        %511 = vmatpush1.bf16.msra.mxu0 0
        %512 = vmatprep.subr.bf16.mxu0 0
        %513 = vmatpush1.bf16.msra.mxu0 0
        %514 = vmatprep.subr.bf16.mxu0 0
        %515 = vmatpush1.bf16.msra.mxu0 0
        %516 = vmatprep.subr.bf16.mxu0 0
        %517 = vmatpush1.bf16.msra.mxu0 0
        %518 = vmatprep.subr.bf16.mxu0 0
        %519 = vmatpush1.bf16.msra.mxu0 0
        %520 = vmatprep.subr.bf16.mxu0 0
        %521 = vmatpush1.bf16.msra.mxu0 0
        %522 = vmatprep.subr.bf16.mxu0 0
        %523 = vmatpush1.bf16.msra.mxu0 0
        %524 = vmatprep.subr.bf16.mxu0 0
        %525 = vmatpush1.bf16.msra.mxu0 0
        %526 = vmatprep.subr.bf16.mxu0 0
        %527 = vmatpush1.bf16.msra.mxu0 0
        %528 = vmatprep.subr.bf16.mxu0 0
        %529 = vmatpush1.bf16.msra.mxu0 0
        %530 = vmatprep.subr.bf16.mxu0 0
        %531 = vmatpush1.bf16.msra.mxu0 0
        %532 = vmatprep.subr.bf16.mxu0 0
        %533 = vmatpush1.bf16.msra.mxu0 0
        %534 = vmatprep.mubr.bf16.mxu0 0
        %535 = vmatmul.mubr.bf16.gmra.mrb[0].mxu0 %v500
        %v536 = vpop.f32.mrb[0].mxu0
        %v537 = vadd.f32 0.0, %v536
        %v538 = vpop.f32.mrb[0].mxu0
        %v539 = vpop.f32.mrb[0].mxu0
        %v540 = vpop.f32.mrb[0].mxu0
        %541 = vdwg.mxu0
        %v542 = vadd.f32 %v495, %v537
        %v543 = vxor.u32 %v542, 2147483648
        %v544 = vmul.f32 %v543, 1.442695
        %v545 = vpow.pop %v544
        %v546 = vadd.f32 %v545, 1.0
        %v547 = vrcp.pop %v546
        %v548 = vmul.f32 1.0, %v547
        %v549 = vtanh.pop %v542
        %v550 = vmul.f32 %v548, %v487
        %552 = vrot.lane.b32.xlu0 %v549, 32
        %v553 = vpop.permute.xlu0 %552
        %v555 = vmul.f32 %v548, %v553
        %557 = vrot.lane.b32.xlu0 %v555, 32
        %v558 = vpop.permute.xlu0 %557
        %v560 = vadd.f32 %v550, %v558
        %v561 = vtanh.pop %v560
        %563 = vrot.lane.b32.xlu0 %v561, 32
        %v564 = vpop.permute.xlu0 %563
        %v566 = vmul.f32 %v548, %v564
        %s567 = sadd.s32 %s381, 1
        %p568 = scmp.lt.s32.totalorder %s567, 12
        %s569 = scalar_select %p568, 1, 0
        %v570 = vstv %s569
        %vm571 = vcmp.eq.s32.totalorder %v570, 1
        %v572 = vsel %vm571, %v566, %v486
        %v573 = vsel %vm571, %v560, %v487
        %575 = vrot.lane.b32.xlu0 %v572, 64
        %v576 = vpop.permute.xlu0 %575
        %578 = vst.msk [vmem:[%s288 + $0x1] sm:$0x1] %vm492, %v576
        %v579 = vpack.c.bf16 %v572, %v572
        %v580 = vld [vmem:[#allocation2 + $0x2] sm:$0x1]
        %582 = vrot.lane.b32.xlu0 %v579, 64
        %v583 = vpop.permute.xlu0 %582
        %v585 = vsel %vm336, %v583, 0
        %587 = vmatprep.subr.bf16.mxu0 0
        %588 = vmatpush1.bf16.msra.mxu0 %v394
        %589 = vmatprep.subr.bf16.mxu0 0
        %590 = vmatpush1.bf16.msra.mxu0 %v395
        %591 = vmatprep.subr.bf16.mxu0 0
        %592 = vmatpush1.bf16.msra.mxu0 0
        %593 = vmatprep.subr.bf16.mxu0 0
        %594 = vmatpush1.bf16.msra.mxu0 0
        %595 = vmatprep.subr.bf16.mxu0 0
        %596 = vmatpush1.bf16.msra.mxu0 0
        %597 = vmatprep.subr.bf16.mxu0 0
        %598 = vmatpush1.bf16.msra.mxu0 0
        %599 = vmatprep.subr.bf16.mxu0 0
        %600 = vmatpush1.bf16.msra.mxu0 0
        %601 = vmatprep.subr.bf16.mxu0 0
        %602 = vmatpush1.bf16.msra.mxu0 0
        %603 = vmatprep.subr.bf16.mxu0 0
        %604 = vmatpush1.bf16.msra.mxu0 0
        %605 = vmatprep.subr.bf16.mxu0 0
        %606 = vmatpush1.bf16.msra.mxu0 0
        %607 = vmatprep.subr.bf16.mxu0 0
        %608 = vmatpush1.bf16.msra.mxu0 0
        %609 = vmatprep.subr.bf16.mxu0 0
        %610 = vmatpush1.bf16.msra.mxu0 0
        %611 = vmatprep.subr.bf16.mxu0 0
        %612 = vmatpush1.bf16.msra.mxu0 0
        %613 = vmatprep.subr.bf16.mxu0 0
        %614 = vmatpush1.bf16.msra.mxu0 0
        %615 = vmatprep.subr.bf16.mxu0 0
        %616 = vmatpush1.bf16.msra.mxu0 0
        %617 = vmatprep.subr.bf16.mxu0 0
        %618 = vmatpush1.bf16.msra.mxu0 0
        %619 = vmatprep.mubr.bf16.mxu0 0
        %620 = vmatmul.mubr.bf16.gmra.mrb[0].mxu0 %v585
        %v621 = vpop.f32.mrb[0].mxu0
        %v622 = vadd.f32 0.0, %v621
        %v623 = vpop.f32.mrb[0].mxu0
        %v624 = vpop.f32.mrb[0].mxu0
        %v625 = vpop.f32.mrb[0].mxu0
        %626 = vdwg.mxu0
        %v627 = vadd.f32 %v580, %v622
        %v628 = vxor.u32 %v627, 2147483648
        %v629 = vmul.f32 %v628, 1.442695
        %v630 = vpow.pop %v629
        %v631 = vadd.f32 %v630, 1.0
        %v632 = vrcp.pop %v631
        %v633 = vmul.f32 1.0, %v632
        %v634 = vtanh.pop %v627
        %v635 = vmul.f32 %v633, %v573
        %637 = vrot.lane.b32.xlu0 %v634, 32
        %v638 = vpop.permute.xlu0 %637
        %v640 = vmul.f32 %v633, %v638
        %642 = vrot.lane.b32.xlu0 %v640, 32
        %v643 = vpop.permute.xlu0 %642
        %v645 = vadd.f32 %v635, %v643
        %v646 = vtanh.pop %v645
        %648 = vrot.lane.b32.xlu0 %v646, 32
        %v649 = vpop.permute.xlu0 %648
        %v651 = vmul.f32 %v633, %v649
        %s652 = sadd.s32 %s381, 2
        %p653 = scmp.lt.s32.totalorder %s652, 12
        %s654 = scalar_select %p653, 1, 0
        %v655 = vstv %s654
        %vm656 = vcmp.eq.s32.totalorder %v655, 1
        %v657 = vsel %vm656, %v651, %v572
        %v658 = vsel %vm656, %v645, %v573
        %660 = vrot.lane.b32.xlu0 %v657, 64
        %v661 = vpop.permute.xlu0 %660
        %663 = vst.msk [vmem:[%s288 + $0x2] sm:$0x1] %vm492, %v661
        %v664 = vpack.c.bf16 %v657, %v657
        %v665 = vld [vmem:[#allocation2 + $0x3] sm:$0x1]
        %667 = vrot.lane.b32.xlu0 %v664, 64
        %v668 = vpop.permute.xlu0 %667
        %v670 = vsel %vm336, %v668, 0
        %672 = vmatprep.subr.bf16.mxu0 0
        %673 = vmatpush1.bf16.msra.mxu0 %v394
        %674 = vmatprep.subr.bf16.mxu0 0
        %675 = vmatpush1.bf16.msra.mxu0 %v395
        %676 = vmatprep.subr.bf16.mxu0 0
        %677 = vmatpush1.bf16.msra.mxu0 0
        %678 = vmatprep.subr.bf16.mxu0 0
        %679 = vmatpush1.bf16.msra.mxu0 0
        %680 = vmatprep.subr.bf16.mxu0 0
        %681 = vmatpush1.bf16.msra.mxu0 0
        %682 = vmatprep.subr.bf16.mxu0 0
        %683 = vmatpush1.bf16.msra.mxu0 0
        %684 = vmatprep.subr.bf16.mxu0 0
        %685 = vmatpush1.bf16.msra.mxu0 0
        %686 = vmatprep.subr.bf16.mxu0 0
        %687 = vmatpush1.bf16.msra.mxu0 0
        %688 = vmatprep.subr.bf16.mxu0 0
        %689 = vmatpush1.bf16.msra.mxu0 0
        %690 = vmatprep.subr.bf16.mxu0 0
        %691 = vmatpush1.bf16.msra.mxu0 0
        %692 = vmatprep.subr.bf16.mxu0 0
        %693 = vmatpush1.bf16.msra.mxu0 0
        %694 = vmatprep.subr.bf16.mxu0 0
        %695 = vmatpush1.bf16.msra.mxu0 0
        %696 = vmatprep.subr.bf16.mxu0 0
        %697 = vmatpush1.bf16.msra.mxu0 0
        %698 = vmatprep.subr.bf16.mxu0 0
        %699 = vmatpush1.bf16.msra.mxu0 0
        %700 = vmatprep.subr.bf16.mxu0 0
        %701 = vmatpush1.bf16.msra.mxu0 0
        %702 = vmatprep.subr.bf16.mxu0 0
        %703 = vmatpush1.bf16.msra.mxu0 0
        %704 = vmatprep.mubr.bf16.mxu0 0
        %705 = vmatmul.mubr.bf16.gmra.mrb[0].mxu0 %v670
        %v706 = vpop.f32.mrb[0].mxu0
        %v707 = vadd.f32 0.0, %v706
        %v708 = vpop.f32.mrb[0].mxu0
        %v709 = vpop.f32.mrb[0].mxu0
        %v710 = vpop.f32.mrb[0].mxu0
        %711 = vdwg.mxu0
        %v712 = vadd.f32 %v665, %v707
        %v713 = vxor.u32 %v712, 2147483648
        %v714 = vmul.f32 %v713, 1.442695
        %v715 = vpow.pop %v714
        %v716 = vadd.f32 %v715, 1.0
        %v717 = vrcp.pop %v716
        %v718 = vmul.f32 1.0, %v717
        %v719 = vtanh.pop %v712
        %v720 = vmul.f32 %v718, %v658
        %722 = vrot.lane.b32.xlu0 %v719, 32
        %v723 = vpop.permute.xlu0 %722
        %v725 = vmul.f32 %v718, %v723
        %727 = vrot.lane.b32.xlu0 %v725, 32
        %v728 = vpop.permute.xlu0 %727
        %v730 = vadd.f32 %v720, %v728
        %v731 = vtanh.pop %v730
        %733 = vrot.lane.b32.xlu0 %v731, 32
        %v734 = vpop.permute.xlu0 %733
        %v736 = vmul.f32 %v718, %v734
        %s737 = sadd.s32 %s381, 3
        %p738 = scmp.lt.s32.totalorder %s737, 12
        %s739 = scalar_select %p738, 1, 0
        %v740 = vstv %s739
        %vm741 = vcmp.eq.s32.totalorder %v740, 1
        %v742 = vsel %vm741, %v736, %v657
        %v743 = vsel %vm741, %v730, %v658
        %745 = vrot.lane.b32.xlu0 %v742, 64
        %v746 = vpop.permute.xlu0 %745
        %748 = vst.msk [vmem:[%s288 + $0x3] sm:$0x1] %vm492, %v746
        %v749 = vpack.c.bf16 %v742, %v742
        %v750 = vld [vmem:[#allocation2 + $0x4] sm:$0x1]
        %752 = vrot.lane.b32.xlu0 %v749, 64
        %v753 = vpop.permute.xlu0 %752
        %v755 = vsel %vm336, %v753, 0
        %757 = vmatprep.subr.bf16.mxu0 0
        %758 = vmatpush1.bf16.msra.mxu0 %v394
        %759 = vmatprep.subr.bf16.mxu0 0
        %760 = vmatpush1.bf16.msra.mxu0 %v395
        %761 = vmatprep.subr.bf16.mxu0 0
        %762 = vmatpush1.bf16.msra.mxu0 0
        %763 = vmatprep.subr.bf16.mxu0 0
        %764 = vmatpush1.bf16.msra.mxu0 0
        %765 = vmatprep.subr.bf16.mxu0 0
        %766 = vmatpush1.bf16.msra.mxu0 0
        %767 = vmatprep.subr.bf16.mxu0 0
        %768 = vmatpush1.bf16.msra.mxu0 0
        %769 = vmatprep.subr.bf16.mxu0 0
        %770 = vmatpush1.bf16.msra.mxu0 0
        %771 = vmatprep.subr.bf16.mxu0 0
        %772 = vmatpush1.bf16.msra.mxu0 0
        %773 = vmatprep.subr.bf16.mxu0 0
        %774 = vmatpush1.bf16.msra.mxu0 0
        %775 = vmatprep.subr.bf16.mxu0 0
        %776 = vmatpush1.bf16.msra.mxu0 0
        %777 = vmatprep.subr.bf16.mxu0 0
        %778 = vmatpush1.bf16.msra.mxu0 0
        %779 = vmatprep.subr.bf16.mxu0 0
        %780 = vmatpush1.bf16.msra.mxu0 0
        %781 = vmatprep.subr.bf16.mxu0 0
        %782 = vmatpush1.bf16.msra.mxu0 0
        %783 = vmatprep.subr.bf16.mxu0 0
        %784 = vmatpush1.bf16.msra.mxu0 0
        %785 = vmatprep.subr.bf16.mxu0 0
        %786 = vmatpush1.bf16.msra.mxu0 0
        %787 = vmatprep.subr.bf16.mxu0 0
        %788 = vmatpush1.bf16.msra.mxu0 0
        %789 = vmatprep.mubr.bf16.mxu0 0
        %790 = vmatmul.mubr.bf16.gmra.mrb[0].mxu0 %v755
        %v791 = vpop.f32.mrb[0].mxu0
        %v792 = vadd.f32 0.0, %v791
        %v793 = vpop.f32.mrb[0].mxu0
        %v794 = vpop.f32.mrb[0].mxu0
        %v795 = vpop.f32.mrb[0].mxu0
        %796 = vdwg.mxu0
        %v797 = vadd.f32 %v750, %v792
        %v798 = vxor.u32 %v797, 2147483648
        %v799 = vmul.f32 %v798, 1.442695
        %v800 = vpow.pop %v799
        %v801 = vadd.f32 %v800, 1.0
        %v802 = vrcp.pop %v801
        %v803 = vmul.f32 1.0, %v802
        %v804 = vtanh.pop %v797
        %v805 = vmul.f32 %v803, %v743
        %807 = vrot.lane.b32.xlu0 %v804, 32
        %v808 = vpop.permute.xlu0 %807
        %v810 = vmul.f32 %v803, %v808
        %812 = vrot.lane.b32.xlu0 %v810, 32
        %v813 = vpop.permute.xlu0 %812
        %v815 = vadd.f32 %v805, %v813
        %v816 = vtanh.pop %v815
        %818 = vrot.lane.b32.xlu0 %v816, 32
        %v819 = vpop.permute.xlu0 %818
        %v821 = vmul.f32 %v803, %v819
        %s822 = sadd.s32 %s381, 4
        %p823 = scmp.lt.s32.totalorder %s822, 12
        %s824 = scalar_select %p823, 1, 0
        %v825 = vstv %s824
        %vm826 = vcmp.eq.s32.totalorder %v825, 1
        %v827 = vsel %vm826, %v821, %v742
        %v828 = vsel %vm826, %v815, %v743
        %830 = vrot.lane.b32.xlu0 %v827, 64
        %v831 = vpop.permute.xlu0 %830
        %833 = vst.msk [vmem:[%s288 + $0x4] sm:$0x1] %vm492, %v831
        %v834 = vpack.c.bf16 %v827, %v827
        %v835 = vld [vmem:[#allocation2 + $0x5] sm:$0x1]
        %837 = vrot.lane.b32.xlu0 %v834, 64
        %v838 = vpop.permute.xlu0 %837
        %v840 = vsel %vm336, %v838, 0
        %842 = vmatprep.subr.bf16.mxu0 0
        %843 = vmatpush1.bf16.msra.mxu0 %v394
        %844 = vmatprep.subr.bf16.mxu0 0
        %845 = vmatpush1.bf16.msra.mxu0 %v395
        %846 = vmatprep.subr.bf16.mxu0 0
        %847 = vmatpush1.bf16.msra.mxu0 0
        %848 = vmatprep.subr.bf16.mxu0 0
        %849 = vmatpush1.bf16.msra.mxu0 0
        %850 = vmatprep.subr.bf16.mxu0 0
        %851 = vmatpush1.bf16.msra.mxu0 0
        %852 = vmatprep.subr.bf16.mxu0 0
        %853 = vmatpush1.bf16.msra.mxu0 0
        %854 = vmatprep.subr.bf16.mxu0 0
        %855 = vmatpush1.bf16.msra.mxu0 0
        %856 = vmatprep.subr.bf16.mxu0 0
        %857 = vmatpush1.bf16.msra.mxu0 0
        %858 = vmatprep.subr.bf16.mxu0 0
        %859 = vmatpush1.bf16.msra.mxu0 0
        %860 = vmatprep.subr.bf16.mxu0 0
        %861 = vmatpush1.bf16.msra.mxu0 0
        %862 = vmatprep.subr.bf16.mxu0 0
        %863 = vmatpush1.bf16.msra.mxu0 0
        %864 = vmatprep.subr.bf16.mxu0 0
        %865 = vmatpush1.bf16.msra.mxu0 0
        %866 = vmatprep.subr.bf16.mxu0 0
        %867 = vmatpush1.bf16.msra.mxu0 0
        %868 = vmatprep.subr.bf16.mxu0 0
        %869 = vmatpush1.bf16.msra.mxu0 0
        %870 = vmatprep.subr.bf16.mxu0 0
        %871 = vmatpush1.bf16.msra.mxu0 0
        %872 = vmatprep.subr.bf16.mxu0 0
        %873 = vmatpush1.bf16.msra.mxu0 0
        %874 = vmatprep.mubr.bf16.mxu0 0
        %875 = vmatmul.mubr.bf16.gmra.mrb[0].mxu0 %v840
        %v876 = vpop.f32.mrb[0].mxu0
        %v877 = vadd.f32 0.0, %v876
        %v878 = vpop.f32.mrb[0].mxu0
        %v879 = vpop.f32.mrb[0].mxu0
        %v880 = vpop.f32.mrb[0].mxu0
        %881 = vdwg.mxu0
        %v882 = vadd.f32 %v835, %v877
        %v883 = vxor.u32 %v882, 2147483648
        %v884 = vmul.f32 %v883, 1.442695
        %v885 = vpow.pop %v884
        %v886 = vadd.f32 %v885, 1.0
        %v887 = vrcp.pop %v886
        %v888 = vmul.f32 1.0, %v887
        %v889 = vtanh.pop %v882
        %v890 = vmul.f32 %v888, %v828
        %892 = vrot.lane.b32.xlu0 %v889, 32
        %v893 = vpop.permute.xlu0 %892
        %v895 = vmul.f32 %v888, %v893
        %897 = vrot.lane.b32.xlu0 %v895, 32
        %v898 = vpop.permute.xlu0 %897
        %v900 = vadd.f32 %v890, %v898
        %v901 = vtanh.pop %v900
        %903 = vrot.lane.b32.xlu0 %v901, 32
        %v904 = vpop.permute.xlu0 %903
        %v906 = vmul.f32 %v888, %v904
        %s907 = sadd.s32 %s381, 5
        %p908 = scmp.lt.s32.totalorder %s907, 12
        %s909 = scalar_select %p908, 1, 0
        %v910 = vstv %s909
        %vm911 = vcmp.eq.s32.totalorder %v910, 1
        %v912 = vsel %vm911, %v906, %v827
        %v913 = vsel %vm911, %v900, %v828
        %915 = vrot.lane.b32.xlu0 %v912, 64
        %v916 = vpop.permute.xlu0 %915
        %918 = vst.msk [vmem:[%s288 + $0x5] sm:$0x1] %vm492, %v916
        %v919 = vpack.c.bf16 %v912, %v912
        %v920 = vld [vmem:[#allocation2 + $0x6] sm:$0x1]
        %922 = vrot.lane.b32.xlu0 %v919, 64
        %v923 = vpop.permute.xlu0 %922
        %v925 = vsel %vm336, %v923, 0
        %927 = vmatprep.subr.bf16.mxu0 0
        %928 = vmatpush1.bf16.msra.mxu0 %v394
        %929 = vmatprep.subr.bf16.mxu0 0
        %930 = vmatpush1.bf16.msra.mxu0 %v395
        %931 = vmatprep.subr.bf16.mxu0 0
        %932 = vmatpush1.bf16.msra.mxu0 0
        %933 = vmatprep.subr.bf16.mxu0 0
        %934 = vmatpush1.bf16.msra.mxu0 0
        %935 = vmatprep.subr.bf16.mxu0 0
        %936 = vmatpush1.bf16.msra.mxu0 0
        %937 = vmatprep.subr.bf16.mxu0 0
        %938 = vmatpush1.bf16.msra.mxu0 0
        %939 = vmatprep.subr.bf16.mxu0 0
        %940 = vmatpush1.bf16.msra.mxu0 0
        %941 = vmatprep.subr.bf16.mxu0 0
        %942 = vmatpush1.bf16.msra.mxu0 0
        %943 = vmatprep.subr.bf16.mxu0 0
        %944 = vmatpush1.bf16.msra.mxu0 0
        %945 = vmatprep.subr.bf16.mxu0 0
        %946 = vmatpush1.bf16.msra.mxu0 0
        %947 = vmatprep.subr.bf16.mxu0 0
        %948 = vmatpush1.bf16.msra.mxu0 0
        %949 = vmatprep.subr.bf16.mxu0 0
        %950 = vmatpush1.bf16.msra.mxu0 0
        %951 = vmatprep.subr.bf16.mxu0 0
        %952 = vmatpush1.bf16.msra.mxu0 0
        %953 = vmatprep.subr.bf16.mxu0 0
        %954 = vmatpush1.bf16.msra.mxu0 0
        %955 = vmatprep.subr.bf16.mxu0 0
        %956 = vmatpush1.bf16.msra.mxu0 0
        %957 = vmatprep.subr.bf16.mxu0 0
        %958 = vmatpush1.bf16.msra.mxu0 0
        %959 = vmatprep.mubr.bf16.mxu0 0
        %960 = vmatmul.mubr.bf16.gmra.mrb[0].mxu0 %v925
        %v961 = vpop.f32.mrb[0].mxu0
        %v962 = vadd.f32 0.0, %v961
        %v963 = vpop.f32.mrb[0].mxu0
        %v964 = vpop.f32.mrb[0].mxu0
        %v965 = vpop.f32.mrb[0].mxu0
        %966 = vdwg.mxu0
        %v967 = vadd.f32 %v920, %v962
        %v968 = vxor.u32 %v967, 2147483648
        %v969 = vmul.f32 %v968, 1.442695
        %v970 = vpow.pop %v969
        %v971 = vadd.f32 %v970, 1.0
        %v972 = vrcp.pop %v971
        %v973 = vmul.f32 1.0, %v972
        %v974 = vtanh.pop %v967
        %v975 = vmul.f32 %v973, %v913
        %977 = vrot.lane.b32.xlu0 %v974, 32
        %v978 = vpop.permute.xlu0 %977
        %v980 = vmul.f32 %v973, %v978
        %982 = vrot.lane.b32.xlu0 %v980, 32
        %v983 = vpop.permute.xlu0 %982
        %v985 = vadd.f32 %v975, %v983
        %v986 = vtanh.pop %v985
        %988 = vrot.lane.b32.xlu0 %v986, 32
        %v989 = vpop.permute.xlu0 %988
        %v991 = vmul.f32 %v973, %v989
        %s992 = sadd.s32 %s381, 6
        %p993 = scmp.lt.s32.totalorder %s992, 12
        %s994 = scalar_select %p993, 1, 0
        %v995 = vstv %s994
        %vm996 = vcmp.eq.s32.totalorder %v995, 1
        %v997 = vsel %vm996, %v991, %v912
        %v998 = vsel %vm996, %v985, %v913
        %1000 = vrot.lane.b32.xlu0 %v997, 64
        %v1001 = vpop.permute.xlu0 %1000
        %1003 = vst.msk [vmem:[%s288 + $0x6] sm:$0x1] %vm492, %v1001
        %v1004 = vpack.c.bf16 %v997, %v997
        %v1005 = vld [vmem:[#allocation2 + $0x7] sm:$0x1]
        %1007 = vrot.lane.b32.xlu0 %v1004, 64
        %v1008 = vpop.permute.xlu0 %1007
        %v1010 = vsel %vm336, %v1008, 0
        %1012 = vmatprep.subr.bf16.mxu0 0
        %1013 = vmatpush1.bf16.msra.mxu0 %v394
        %1014 = vmatprep.subr.bf16.mxu0 0
        %1015 = vmatpush1.bf16.msra.mxu0 %v395
        %1016 = vmatprep.subr.bf16.mxu0 0
        %1017 = vmatpush1.bf16.msra.mxu0 0
        %1018 = vmatprep.subr.bf16.mxu0 0
        %1019 = vmatpush1.bf16.msra.mxu0 0
        %1020 = vmatprep.subr.bf16.mxu0 0
        %1021 = vmatpush1.bf16.msra.mxu0 0
        %1022 = vmatprep.subr.bf16.mxu0 0
        %1023 = vmatpush1.bf16.msra.mxu0 0
        %1024 = vmatprep.subr.bf16.mxu0 0
        %1025 = vmatpush1.bf16.msra.mxu0 0
        %1026 = vmatprep.subr.bf16.mxu0 0
        %1027 = vmatpush1.bf16.msra.mxu0 0
        %1028 = vmatprep.subr.bf16.mxu0 0
        %1029 = vmatpush1.bf16.msra.mxu0 0
        %1030 = vmatprep.subr.bf16.mxu0 0
        %1031 = vmatpush1.bf16.msra.mxu0 0
        %1032 = vmatprep.subr.bf16.mxu0 0
        %1033 = vmatpush1.bf16.msra.mxu0 0
        %1034 = vmatprep.subr.bf16.mxu0 0
        %1035 = vmatpush1.bf16.msra.mxu0 0
        %1036 = vmatprep.subr.bf16.mxu0 0
        %1037 = vmatpush1.bf16.msra.mxu0 0
        %1038 = vmatprep.subr.bf16.mxu0 0
        %1039 = vmatpush1.bf16.msra.mxu0 0
        %1040 = vmatprep.subr.bf16.mxu0 0
        %1041 = vmatpush1.bf16.msra.mxu0 0
        %1042 = vmatprep.subr.bf16.mxu0 0
        %1043 = vmatpush1.bf16.msra.mxu0 0
        %1044 = vmatprep.mubr.bf16.mxu0 0
        %1045 = vmatmul.mubr.bf16.gmra.mrb[0].mxu0 %v1010
        %v1046 = vpop.f32.mrb[0].mxu0
        %v1047 = vadd.f32 0.0, %v1046
        %v1048 = vpop.f32.mrb[0].mxu0
        %v1049 = vpop.f32.mrb[0].mxu0
        %v1050 = vpop.f32.mrb[0].mxu0
        %1051 = vdwg.mxu0
        %v1052 = vadd.f32 %v1005, %v1047
        %v1053 = vxor.u32 %v1052, 2147483648
        %v1054 = vmul.f32 %v1053, 1.442695
        %v1055 = vpow.pop %v1054
        %v1056 = vadd.f32 %v1055, 1.0
        %v1057 = vrcp.pop %v1056
        %v1058 = vmul.f32 1.0, %v1057
        %v1059 = vtanh.pop %v1052
        %v1060 = vmul.f32 %v1058, %v998
        %1062 = vrot.lane.b32.xlu0 %v1059, 32
        %v1063 = vpop.permute.xlu0 %1062
        %v1065 = vmul.f32 %v1058, %v1063
        %1067 = vrot.lane.b32.xlu0 %v1065, 32
        %v1068 = vpop.permute.xlu0 %1067
        %v1070 = vadd.f32 %v1060, %v1068
        %v1071 = vtanh.pop %v1070
        %1073 = vrot.lane.b32.xlu0 %v1071, 32
        %v1074 = vpop.permute.xlu0 %1073
        %v1076 = vmul.f32 %v1058, %v1074
        %s1077 = sadd.s32 %s381, 7
        %p1078 = scmp.lt.s32.totalorder %s1077, 12
        %s1079 = scalar_select %p1078, 1, 0
        %v1080 = vstv %s1079
        %vm1081 = vcmp.eq.s32.totalorder %v1080, 1
        %v1082 = vsel %vm1081, %v1076, %v997
        %v1083 = vsel %vm1081, %v1070, %v998
        %1085 = vrot.lane.b32.xlu0 %v1082, 64
        %v1086 = vpop.permute.xlu0 %1085
        %1088 = vst.msk [vmem:[%s288 + $0x7] sm:$0x1] %vm492, %v1086
        %1089 = vst.msk [vmem:[#allocation5] sm:$0x1] %vm492, %v1086
        %1091 = vrot.lane.b32.xlu0 %v1083, 96
        %v1092 = vpop.permute.xlu0 %1091
        %1094 = vst.msk [vmem:[#allocation7] sm:$0x1] %vm492, %v1092
        %s1095 = sand.u32 %s163, 1
        %s1096 = scalar_lea.sflag [#allocation4], %s1095
        %s1097 = sand.u32 %s163, 1
        %s1098 = smul.addr %s1097, 8
        %s1099 = scalar_lea.vmem [#allocation3], %s1098
        // Predicated region
        $region49: #{encode_sequence.1} parent=43 // pred_check
          %p1100 = pneg %p173
        $region50: #{encode_sequence.1} parent=43 // pred_check_branch
          %1102 = sbr.rel (%p1100) target = $region52
        $region51: #{encode_sequence.1} parent=43 // pred_region
          %s1104 = ssub.s32 128, 128
          %1105 = vsyncadd %s1096, %s1104
          %s1106 = smul.addr %s24, 128
          %s1107 = scalar_lea.hbm %s6, %s1106
          %s1109 = sshll.u32 %s1099, 4
          %s1110 = int_to_ptr.vmem [resolvable:$true] %s1109
          %1112 = dma.vmem_to_hbm [thread:$0]  %s1110, 128, %s1107, %s1096
        $region52: #{encode_sequence.1} parent=43 // pred_fallthru
          _
        // Predicated region
        $region53: #{encode_sequence.1} parent=43 // pred_check
          %p1113 = pneg %p194
        $region54: #{encode_sequence.1} parent=43 // pred_check_branch
          %1115 = sbr.rel (%p1113) target = $region56
        $region55: #{encode_sequence.1} parent=43 // pred_region
          %s1117 = ssub.s32 16, 16
          %1118 = vsyncadd [#allocation6], %s1117
          %s1120 = sshll.u32 [#allocation5], 4
          %s1121 = int_to_ptr.vmem [resolvable:$true] %s1120
          %1123 = dma.vmem_to_hbm [thread:$0]  %s1121, 16, %s7, [#allocation6]
        $region56: #{encode_sequence.1} parent=43 // pred_fallthru
          _
        // Predicated region
        $region57: #{encode_sequence.1} parent=43 // pred_check
          %p1124 = pneg %p215
        $region58: #{encode_sequence.1} parent=43 // pred_check_branch
          %1126 = sbr.rel (%p1124) target = $region60
        $region59: #{encode_sequence.1} parent=43 // pred_region
          %s1128 = ssub.s32 16, 16
          %1129 = vsyncadd [#allocation6], %s1128
          %s1131 = sshll.u32 [#allocation7], 4
          %s1132 = int_to_ptr.vmem [resolvable:$true] %s1131
          %1134 = dma.vmem_to_hbm [thread:$0]  %s1132, 16, %s8, [#allocation6]
        $region60: #{encode_sequence.1} parent=43 // pred_fallthru
          _
        // Predicated region
        $region61: #{encode_sequence.1} parent=43 // pred_check
          %p1135 = pneg %p194
        $region62: #{encode_sequence.1} parent=43 // pred_check_branch
          %1137 = sbr.rel (%p1135) target = $region64
        $region63: #{encode_sequence.1} parent=43 // pred_region
          %1138 = dma.done [#allocation6], 16
        $region64: #{encode_sequence.1} parent=43 // pred_fallthru
          _
        // Predicated region
        $region65: #{encode_sequence.1} parent=43 // pred_check
          %p1139 = pneg %p215
        $region66: #{encode_sequence.1} parent=43 // pred_check_branch
          %1141 = sbr.rel (%p1139) target = $region68
        $region67: #{encode_sequence.1} parent=43 // pred_region
          %1142 = dma.done [#allocation6], 16
        $region68: #{encode_sequence.1} parent=43 // pred_fallthru
          _
      $region44: #{encode_sequence.1} parent=5 // pred_fallthru
        _
      %p1143 = scmp.le.s32.totalorder 2, %s19
      // Predicated region
      $region69: #{encode_sequence.1} parent=5 // pred_check
        %p1144 = pneg %p1143
      $region70: #{encode_sequence.1} parent=5 // pred_check_branch
        %1146 = sbr.rel (%p1144) target = $region72
      $region71: #{encode_sequence.1} parent=5 // pred_region
        %s1147 = ssub.s32 %s19, 2
        // Predicated region
        $region73: #{encode_sequence.1} parent=71 // pred_check
          %p1148 = pneg %p179
        $region74: #{encode_sequence.1} parent=71 // pred_check_branch
          %1150 = sbr.rel (%p1148) target = $region76
        $region75: #{encode_sequence.1} parent=71 // pred_region
          %s1151 = sand.u32 %s164, 1
          %s1152 = scalar_lea.sflag [#allocation4], %s1151
          %s1153 = sand.u32 %s164, 1
          %s1154 = smul.addr %s1153, 8
          %s1155 = scalar_lea.vmem [#allocation3], %s1154
          %1156 = dma.done %s1152, 128
        $region76: #{encode_sequence.1} parent=71 // pred_fallthru
          _
      $region72: #{encode_sequence.1} parent=5 // pred_fallthru
        _
    $region6: #{encode_sequence.1} parent=1 // loop_footer
      %s23 = sadd.s32 1, %s19
    $region7: #{encode_sequence.1} parent=1 // loop_footer_branch
      %18 = sbr.rel target = $region3
    $region8: #{encode_sequence.1} parent=1 // loop_exit
      _
    %1157 = vsyncpa [#allocation4], 1
    %s1158 = scalar_lea.sflag [#allocation4], 1
    %1159 = vsyncpa %s1158, 1
    %1160 = vsyncpa [#allocation6], 1

</llo_original>
